<compile_context>
chip_gen: v7x
topology: tpu7x:2x2x1
jax: 0.10.0
libtpu: 0.0.40
codegen_flags: <defaults>
</compile_context>

<pallas_src>
import jax
import jax.numpy as jnp
import numpy as np
from jax.experimental import pallas as pl
from jax.experimental.pallas import tpu as pltpu


# ----------------------------------------------------------------------------
# In-kernel building block: Conv1d(k=3,s=1,p=1) + folded BN + ReLU + MaxPool(2)
# x is (Cin, N) with N = TB*L_cur: TB samples packed contiguously on lanes.
# ----------------------------------------------------------------------------
def _conv_bn_relu_pool(x, wm, shift, mask_m1, mask_p1, sel_even, mxu_dtype):
    """wm: (Cout, 3*Cin), tap-major (col = tap*Cin + c) with BN scale folded in;
    shift: (Cout, 1); mask_m1/mask_p1: (1, N) zero at per-sample start/end
    lanes; sel_even: (N, N//2) 0/1 even-column selector.
    Returns (Cout, N//2)."""
    cin, n = x.shape

    # 'same'-padding halos via XLU lane rotation.  The boundary masks zero the
    # lanes that would otherwise leak across packed-sample boundaries (which
    # also realizes the conv's zero padding).  roll(x, 1)[i] = x[i-1];
    # roll(x, n-1)[i] = x[i+1 mod n].
    x_m1 = pltpu.roll(x, 1, 1) * mask_m1          # x[t-1]
    x_p1 = pltpu.roll(x, n - 1, 1) * mask_p1      # x[t+1]

    if cin == 1:
        # Stage 1 is pure VPU work: single input row against per-tap columns
        # (Cout on sublanes, packed length on lanes -> lane dense).
        y = wm[:, 0:1] * x_m1 + wm[:, 1:2] * x + wm[:, 2:3] * x_p1
    else:
        # Fused-tap conv as a single MXU matmul: (Cout, 3Cin) @ (3Cin, N).
        xim = jnp.concatenate([x_m1, x, x_p1], axis=0).astype(mxu_dtype)
        y = jnp.dot(wm, xim, preferred_element_type=jnp.float32)

    # BN scale is folded into wm; epilogue is per-channel shift + ReLU only.
    y = jnp.maximum(y + shift, 0.0)                                # (Cout, N)

    # MaxPool1d(2,2) along lanes: pairwise max via lane roll (XLU), then pick
    # even columns with ONE 0/1 selection matmul.  The roll wraparound only
    # touches odd columns, which sel_even never reads.
    tmp = jnp.maximum(y, pltpu.roll(y, n - 1, 1))                  # max(y[2t], y[2t+1]) at col 2t
    return jnp.dot(tmp.astype(mxu_dtype), sel_even,
                   preferred_element_type=jnp.float32)             # (Cout, N//2)


def _make_kernel(mxu_dtype):
    def kernel(x_ref,
               w1_ref, t1_ref, m1a_ref, p1a_ref, sel1_ref,
               w2_ref, t2_ref, m1b_ref, p1b_ref, sel2_ref,
               w3_ref, t3_ref, m1c_ref, p1c_ref, sel3_ref,
               avg_ref, wfc_ref, bfc_ref,
               o_ref):
        x = x_ref[0]                                               # (1, TB*L)
        h = _conv_bn_relu_pool(x, w1_ref[...], t1_ref[...], m1a_ref[...],
                               p1a_ref[...], sel1_ref[...], mxu_dtype)
        h = _conv_bn_relu_pool(h, w2_ref[...], t2_ref[...], m1b_ref[...],
                               p1b_ref[...], sel2_ref[...], mxu_dtype)
        h = _conv_bn_relu_pool(h, w3_ref[...], t3_ref[...], m1c_ref[...],
                               p1c_ref[...], sel3_ref[...], mxu_dtype)

        # AdaptiveAvgPool1d(1) per packed sample: one segment-mean matmul,
        # (64, TB*L/8) @ (TB*L/8, TB) -> (64, TB).
        g = jnp.dot(h.astype(mxu_dtype), avg_ref[...],
                    preferred_element_type=jnp.float32)

        # fc: (ncls, 64) @ (64, TB) + (ncls, 1) -> batch on lanes.
        logits = jnp.dot(wfc_ref[...], g.astype(mxu_dtype),
                         preferred_element_type=jnp.float32) + bfc_ref[...]
        o_ref[...] = logits[None, :, :].astype(o_ref.dtype)        # (1, ncls, TB)
    return kernel


# ----------------------------------------------------------------------------
# Wrapper: lane-packed batch grid, all constants VMEM-resident.
# ----------------------------------------------------------------------------
def sercnn_forward(x_ncl, params, *, samples_per_step=None, use_bf16_matmul=False):
    """x_ncl: (B, 1, L) float32 (PyTorch NCL). Returns logits (B, num_classes)."""
    B, cin, L = x_ncl.shape
    assert cin == 1, "SERCNN expects a single input channel"
    assert L % 8 == 0, "need L divisible by 8 (three MaxPool1d(2) stages)"
    num_classes = params["wfc"].shape[0]

    # Samples packed along lanes per grid step: target ~512 lanes (>=256 keeps
    # MXU N-dim and VPU lanes dense on v6e/v7x, >=128 suffices on v5e).
    if samples_per_step is None:
        samples_per_step = max(1, min(B, max(1, 512 // L)))
    TB = int(samples_per_step)
    G = -(-B // TB)                       # grid steps (>=2 for B=16, L=64 -> v7x uses both TCs)
    B_pad = G * TB
    N = TB * L

    x = x_ncl.astype(jnp.float32)
    if B_pad != B:
        x = jnp.pad(x, ((0, B_pad - B), (0, 0), (0, 0)))
    # Pure layout plumbing: sample (g*TB + i) occupies lanes [i*L, (i+1)*L) of row g.
    x = x.reshape(B_pad, L).reshape(G, 1, N)

    # --- precomputed constants (VMEM-resident via constant index_maps) ------
    def seg_masks(n, seg):
        idx = np.arange(n)
        m1 = (idx % seg != 0).astype(np.float32)[None, :]        # zero at segment starts
        p1 = (idx % seg != seg - 1).astype(np.float32)[None, :]  # zero at segment ends
        return jnp.asarray(m1), jnp.asarray(p1)

    def make_sel_even(n):
        r = np.arange(n)[:, None]
        c = np.arange(n // 2)[None, :]
        return jnp.asarray((r == 2 * c).astype(np.float32))      # picks column 2c

    def make_seg_mean(n, groups):
        seg = n // groups
        r = np.arange(n)[:, None]
        c = np.arange(groups)[None, :]
        return jnp.asarray(((r // seg) == c).astype(np.float32) / seg)

    m1a, p1a = seg_masks(N, L)
    m1b, p1b = seg_masks(N // 2, L // 2)
    m1c, p1c = seg_masks(N // 4, L // 4)
    sel1, sel2, sel3 = make_sel_even(N), make_sel_even(N // 2), make_sel_even(N // 4)
    avg = make_seg_mean(N // 8, TB)

    # MXU operand dtype (bf16 recommended on v5e/v6e/v7x MXUs; f32 accumulation
    # is kept via preferred_element_type).  Elementwise math stays f32.
    mxu_dtype = jnp.bfloat16 if use_bf16_matmul else jnp.float32
    cast = lambda a: a.astype(mxu_dtype)
    w2, w3, wfc = cast(params["w2"]), cast(params["w3"]), cast(params["wfc"])
    sel1, sel2, sel3, avg = cast(sel1), cast(sel2), cast(sel3), cast(avg)

    const_args = (params["w1"], params["t1"], m1a, p1a, sel1,
                  w2, params["t2"], m1b, p1b, sel2,
                  w3, params["t3"], m1c, p1c, sel3,
                  avg, wfc, params["bfc"])
    # Constant index_maps: same block every step -> stays VMEM-resident.
    const_specs = [pl.BlockSpec(c.shape, lambda g: (0, 0)) for c in const_args]

    out = pl.pallas_call(
        _make_kernel(mxu_dtype),
        out_shape=jax.ShapeDtypeStruct((G, num_classes, TB), jnp.float32),
        grid=(G,),
        in_specs=[pl.BlockSpec((1, 1, N), lambda g: (g, 0, 0))] + const_specs,
        out_specs=pl.BlockSpec((1, num_classes, TB), lambda g: (g, 0, 0)),
        compiler_params=pltpu.CompilerParams(
            dimension_semantics=("parallel",),       # 2 TCs on v7x; no-op v5e/v6e
            vmem_limit_bytes=32 * 1024 * 1024),
    )(x, *const_args)

    # (G, ncls, TB) -> (B, ncls)
    logits = jnp.transpose(out, (0, 2, 1)).reshape(B_pad, num_classes)
    return logits[:B]


# ----------------------------------------------------------------------------
# Parameters: raw (PyTorch-shaped) params + fold into kernel layout.
# ----------------------------------------------------------------------------
def init_raw_params(key, num_classes=8):
    ks = iter(jax.random.split(key, 32))

    def conv_bn(cin, cout):
        w = jax.random.normal(next(ks), (cout, cin, 3), jnp.float32) \
            * (1.0 / np.sqrt(3.0 * cin))
        b = 0.05 * jax.random.normal(next(ks), (cout,), jnp.float32)
        gamma = 1.0 + 0.1 * jax.random.normal(next(ks), (cout,), jnp.float32)
        beta = 0.1 * jax.random.normal(next(ks), (cout,), jnp.float32)
        mean = 0.1 * jax.random.normal(next(ks), (cout,), jnp.float32)
        var = 1.0 + 0.1 * jax.random.uniform(next(ks), (cout,), jnp.float32)
        return dict(w=w, b=b, gamma=gamma, beta=beta, mean=mean, var=var)

    return dict(
        conv1=conv_bn(1, 16), conv2=conv_bn(16, 32), conv3=conv_bn(32, 64),
        fc_w=jax.random.normal(next(ks), (num_classes, 64), jnp.float32)
        * (1.0 / np.sqrt(64.0)),
        fc_b=0.05 * jax.random.normal(next(ks), (num_classes,), jnp.float32))


def fold_params(raw, eps=1e-5):
    """Fold eval-mode BatchNorm: scale goes into the conv weights (fused-tap
    (Cout, 3*Cin) layout), only the shift stays as a separate per-channel term."""
    def fold(c):
        cout, cin, k = c["w"].shape
        scale = c["gamma"] / jnp.sqrt(c["var"] + eps)                 # (Cout,)
        # wm[o, tap*Cin + ci] = w[o, ci, tap]  (tap 0 -> t-1, 1 -> t, 2 -> t+1)
        wm = jnp.transpose(c["w"], (0, 2, 1)).reshape(cout, k * cin)
        wm = wm * scale[:, None]                                      # BN scale folded in
        shift = c["beta"] - c["mean"] * scale + c["b"] * scale
        return wm, shift.reshape(cout, 1)

    w1, t1 = fold(raw["conv1"])
    w2, t2 = fold(raw["conv2"])
    w3, t3 = fold(raw["conv3"])
    return dict(w1=w1, t1=t1, w2=w2, t2=t2, w3=w3, t3=t3,
                wfc=raw["fc_w"],                      # (ncls, 64)
                bfc=raw["fc_b"].reshape(-1, 1))       # (ncls, 1)


# ----------------------------------------------------------------------------
# PyTorch-faithful JAX reference (plain XLA, outside the kernel).
# ----------------------------------------------------------------------------
def sercnn_reference(x_ncl, raw, eps=1e-5):
    h = x_ncl.astype(jnp.float32)
    for name in ("conv1", "conv2", "conv3"):
        c = raw[name]
        h = jax.lax.conv_general_dilated(
            h, c["w"], window_strides=(1,), padding=((1, 1),),
            dimension_numbers=("NCH", "OIH", "NCH"))
        h = h + c["b"][None, :, None]
        h = (h - c["mean"][None, :, None]) \
            / jnp.sqrt(c["var"][None, :, None] + eps)
        h = h * c["gamma"][None, :, None] + c["beta"][None, :, None]
        h = jnp.maximum(h, 0.0)
        h = jax.lax.reduce_window(h, -jnp.inf, jax.lax.max,
                                  (1, 1, 2), (1, 1, 2), "VALID")
    g = jnp.mean(h, axis=2)                           # AdaptiveAvgPool1d(1)
    return g @ raw["fc_w"].T + raw["fc_b"][None, :]   # nn.Linear
    # (nn.Dropout(0.3) is defined in the module but not used in forward().)


if __name__ == "__main__":
    key = jax.random.PRNGKey(0)
    kx, kp = jax.random.split(key)

    # PyTorch-style NCL input: (batch, in_channels=1, length).
    # B=16, TB=8 -> 512-lane packed blocks, 2 grid steps (both v7x TCs usable).
    B, L, num_classes = 16, 64, 8
    x = jax.random.normal(kx, (B, 1, L), jnp.float32)

    raw = init_raw_params(kp, num_classes)
    params = fold_params(raw)
    ref = jax.block_until_ready(sercnn_reference(x, raw))

    # f32 MXU operands: tight check against the PyTorch-faithful reference.
    out = jax.block_until_ready(sercnn_forward(x, params))
    assert out.shape == (B, num_classes)
    np.testing.assert_allclose(np.asarray(out), np.asarray(ref),
                               rtol=2e-3, atol=2e-3)

    # bf16 MXU operands (native MXU dtype on v5e/v6e/v7x), f32 accumulation:
    # looser tolerance per bf16 operand rounding.
    out_bf16 = jax.block_until_ready(
        sercnn_forward(x, params, use_bf16_matmul=True))
    np.testing.assert_allclose(np.asarray(out_bf16), np.asarray(ref),
                               rtol=1e-1, atol=1e-1)

    print("KERNEL_OK")
</pallas_src>

<mosaic_0001>
module attributes {stable_mosaic.version = 11 : i64} {
  func.func @kernel(%arg0: i32, %arg1: memref<1x1x512xf32, #tpu.memory_space<vmem>>, %arg2: memref<16x3xf32, #tpu.memory_space<vmem>>, %arg3: memref<16x1xf32, #tpu.memory_space<vmem>>, %arg4: memref<1x512xf32, #tpu.memory_space<vmem>>, %arg5: memref<1x512xf32, #tpu.memory_space<vmem>>, %arg6: memref<512x256xf32, #tpu.memory_space<vmem>>, %arg7: memref<32x48xf32, #tpu.memory_space<vmem>>, %arg8: memref<32x1xf32, #tpu.memory_space<vmem>>, %arg9: memref<1x256xf32, #tpu.memory_space<vmem>>, %arg10: memref<1x256xf32, #tpu.memory_space<vmem>>, %arg11: memref<256x128xf32, #tpu.memory_space<vmem>>, %arg12: memref<64x96xf32, #tpu.memory_space<vmem>>, %arg13: memref<64x1xf32, #tpu.memory_space<vmem>>, %arg14: memref<1x128xf32, #tpu.memory_space<vmem>>, %arg15: memref<1x128xf32, #tpu.memory_space<vmem>>, %arg16: memref<128x64xf32, #tpu.memory_space<vmem>>, %arg17: memref<64x8xf32, #tpu.memory_space<vmem>>, %arg18: memref<8x64xf32, #tpu.memory_space<vmem>>, %arg19: memref<8x1xf32, #tpu.memory_space<vmem>>, %arg20: memref<1x8x8xf32, #tpu.memory_space<vmem>>) attributes {dimension_semantics = [#tpu.dimension_semantics<parallel>], iteration_bounds = array<i64: 2>, scalar_prefetch = 0 : i64, scratch_operands = 0 : i64, tpu.core_type = #tpu.core_type<tc>, window_params = [{transform_indices = @transform_0, window_bounds = array<i64: 1, 1, 512>}, {pipeline_mode = #tpu.pipeline_mode<synchronous>, transform_indices = @transform_1, window_bounds = array<i64: 16, 3>}, {pipeline_mode = #tpu.pipeline_mode<synchronous>, transform_indices = @transform_2, window_bounds = array<i64: 16, 1>}, {pipeline_mode = #tpu.pipeline_mode<synchronous>, transform_indices = @transform_3, window_bounds = array<i64: 1, 512>}, {pipeline_mode = #tpu.pipeline_mode<synchronous>, transform_indices = @transform_4, window_bounds = array<i64: 1, 512>}, {pipeline_mode = #tpu.pipeline_mode<synchronous>, transform_indices = @transform_5, window_bounds = array<i64: 512, 256>}, {pipeline_mode = #tpu.pipeline_mode<synchronous>, transform_indices = @transform_6, window_bounds = array<i64: 32, 48>}, {pipeline_mode = #tpu.pipeline_mode<synchronous>, transform_indices = @transform_7, window_bounds = array<i64: 32, 1>}, {pipeline_mode = #tpu.pipeline_mode<synchronous>, transform_indices = @transform_8, window_bounds = array<i64: 1, 256>}, {pipeline_mode = #tpu.pipeline_mode<synchronous>, transform_indices = @transform_9, window_bounds = array<i64: 1, 256>}, {pipeline_mode = #tpu.pipeline_mode<synchronous>, transform_indices = @transform_10, window_bounds = array<i64: 256, 128>}, {pipeline_mode = #tpu.pipeline_mode<synchronous>, transform_indices = @transform_11, window_bounds = array<i64: 64, 96>}, {pipeline_mode = #tpu.pipeline_mode<synchronous>, transform_indices = @transform_12, window_bounds = array<i64: 64, 1>}, {pipeline_mode = #tpu.pipeline_mode<synchronous>, transform_indices = @transform_13, window_bounds = array<i64: 1, 128>}, {pipeline_mode = #tpu.pipeline_mode<synchronous>, transform_indices = @transform_14, window_bounds = array<i64: 1, 128>}, {pipeline_mode = #tpu.pipeline_mode<synchronous>, transform_indices = @transform_15, window_bounds = array<i64: 128, 64>}, {pipeline_mode = #tpu.pipeline_mode<synchronous>, transform_indices = @transform_16, window_bounds = array<i64: 64, 8>}, {pipeline_mode = #tpu.pipeline_mode<synchronous>, transform_indices = @transform_17, window_bounds = array<i64: 8, 64>}, {pipeline_mode = #tpu.pipeline_mode<synchronous>, transform_indices = @transform_18, window_bounds = array<i64: 8, 1>}, {transform_indices = @transform_19, window_bounds = array<i64: 1, 8, 8>}]} {
    %c0 = arith.constant 0 : index
    %c0_0 = arith.constant 0 : index
    %c0_1 = arith.constant 0 : index
    %0 = vector.load %arg1[%c0, %c0_0, %c0_1] : memref<1x1x512xf32, #tpu.memory_space<vmem>>, vector<1x1x512xf32>
    %1 = vector.shape_cast %0 : vector<1x1x512xf32> to vector<1x512xf32>
    %c0_2 = arith.constant 0 : index
    %c0_3 = arith.constant 0 : index
    %2 = vector.load %arg2[%c0_2, %c0_3] : memref<16x3xf32, #tpu.memory_space<vmem>>, vector<16x3xf32>
    %c0_4 = arith.constant 0 : index
    %c0_5 = arith.constant 0 : index
    %3 = vector.load %arg3[%c0_4, %c0_5] : memref<16x1xf32, #tpu.memory_space<vmem>>, vector<16x1xf32>
    %c0_6 = arith.constant 0 : index
    %c0_7 = arith.constant 0 : index
    %4 = vector.load %arg4[%c0_6, %c0_7] : memref<1x512xf32, #tpu.memory_space<vmem>>, vector<1x512xf32>
    %c0_8 = arith.constant 0 : index
    %c0_9 = arith.constant 0 : index
    %5 = vector.load %arg5[%c0_8, %c0_9] : memref<1x512xf32, #tpu.memory_space<vmem>>, vector<1x512xf32>
    %c0_10 = arith.constant 0 : index
    %c0_11 = arith.constant 0 : index
    %6 = vector.load %arg6[%c0_10, %c0_11] : memref<512x256xf32, #tpu.memory_space<vmem>>, vector<512x256xf32>
    %c1_i32 = arith.constant 1 : i32
    %7 = tpu.dynamic_rotate %1 by %c1_i32 dim 1 : vector<1x512xf32>, i32 -> vector<1x512xf32>
    %8 = arith.mulf %7, %4 : vector<1x512xf32>
    %c511_i32 = arith.constant 511 : i32
    %9 = tpu.dynamic_rotate %1 by %c511_i32 dim 1 : vector<1x512xf32>, i32 -> vector<1x512xf32>
    %10 = arith.mulf %9, %5 : vector<1x512xf32>
    %11 = vector.extract_strided_slice %2 {offsets = [0, 0], sizes = [16, 1], strides = [1, 1]} : vector<16x3xf32> to vector<16x1xf32>
    %12 = vector.broadcast %11 : vector<16x1xf32> to vector<16x512xf32>
    %13 = vector.broadcast %8 : vector<1x512xf32> to vector<16x512xf32>
    %14 = arith.mulf %12, %13 : vector<16x512xf32>
    %15 = vector.extract_strided_slice %2 {offsets = [0, 1], sizes = [16, 1], strides = [1, 1]} : vector<16x3xf32> to vector<16x1xf32>
    %16 = vector.broadcast %15 : vector<16x1xf32> to vector<16x512xf32>
    %17 = vector.broadcast %1 : vector<1x512xf32> to vector<16x512xf32>
    %18 = arith.mulf %16, %17 : vector<16x512xf32>
    %19 = arith.addf %14, %18 : vector<16x512xf32>
    %20 = vector.extract_strided_slice %2 {offsets = [0, 2], sizes = [16, 1], strides = [1, 1]} : vector<16x3xf32> to vector<16x1xf32>
    %21 = vector.broadcast %20 : vector<16x1xf32> to vector<16x512xf32>
    %22 = vector.broadcast %10 : vector<1x512xf32> to vector<16x512xf32>
    %23 = arith.mulf %21, %22 : vector<16x512xf32>
    %24 = arith.addf %19, %23 : vector<16x512xf32>
    %25 = vector.broadcast %3 : vector<16x1xf32> to vector<16x512xf32>
    %26 = arith.addf %24, %25 : vector<16x512xf32>
    %cst = arith.constant 0.000000e+00 : f32
    %27 = vector.broadcast %cst : f32 to vector<16x512xf32>
    %28 = arith.maximumf %26, %27 : vector<16x512xf32>
    %c511_i32_12 = arith.constant 511 : i32
    %29 = tpu.dynamic_rotate %28 by %c511_i32_12 dim 1 : vector<16x512xf32>, i32 -> vector<16x512xf32>
    %30 = arith.maximumf %28, %29 : vector<16x512xf32>
    %cst_13 = arith.constant dense<0.000000e+00> : vector<16x256xf32>
    %31 = tpu.matmul %30, %6, %cst_13 {dimension_numbers = #tpu.dot_dimension_numbers<[1], [0], [0], [1], [0, 0, 1, 1], [], []>} : vector<16x512xf32>, vector<512x256xf32>, vector<16x256xf32> -> vector<16x256xf32>
    %c0_14 = arith.constant 0 : index
    %c0_15 = arith.constant 0 : index
    %32 = vector.load %arg7[%c0_14, %c0_15] : memref<32x48xf32, #tpu.memory_space<vmem>>, vector<32x48xf32>
    %c0_16 = arith.constant 0 : index
    %c0_17 = arith.constant 0 : index
    %33 = vector.load %arg8[%c0_16, %c0_17] : memref<32x1xf32, #tpu.memory_space<vmem>>, vector<32x1xf32>
    %c0_18 = arith.constant 0 : index
    %c0_19 = arith.constant 0 : index
    %34 = vector.load %arg9[%c0_18, %c0_19] : memref<1x256xf32, #tpu.memory_space<vmem>>, vector<1x256xf32>
    %c0_20 = arith.constant 0 : index
    %c0_21 = arith.constant 0 : index
    %35 = vector.load %arg10[%c0_20, %c0_21] : memref<1x256xf32, #tpu.memory_space<vmem>>, vector<1x256xf32>
    %c0_22 = arith.constant 0 : index
    %c0_23 = arith.constant 0 : index
    %36 = vector.load %arg11[%c0_22, %c0_23] : memref<256x128xf32, #tpu.memory_space<vmem>>, vector<256x128xf32>
    %c1_i32_24 = arith.constant 1 : i32
    %37 = tpu.dynamic_rotate %31 by %c1_i32_24 dim 1 : vector<16x256xf32>, i32 -> vector<16x256xf32>
    %38 = vector.broadcast %34 : vector<1x256xf32> to vector<16x256xf32>
    %39 = arith.mulf %37, %38 : vector<16x256xf32>
    %c255_i32 = arith.constant 255 : i32
    %40 = tpu.dynamic_rotate %31 by %c255_i32 dim 1 : vector<16x256xf32>, i32 -> vector<16x256xf32>
    %41 = vector.broadcast %35 : vector<1x256xf32> to vector<16x256xf32>
    %42 = arith.mulf %40, %41 : vector<16x256xf32>
    %43 = tpu.concatenate %39, %31, %42 in 0 : vector<16x256xf32>, vector<16x256xf32>, vector<16x256xf32> -> vector<48x256xf32>
    %cst_25 = arith.constant dense<0.000000e+00> : vector<32x256xf32>
    %44 = tpu.matmul %32, %43, %cst_25 {dimension_numbers = #tpu.dot_dimension_numbers<[1], [0], [0], [1], [0, 0, 1, 1], [], []>} : vector<32x48xf32>, vector<48x256xf32>, vector<32x256xf32> -> vector<32x256xf32>
    %45 = vector.broadcast %33 : vector<32x1xf32> to vector<32x256xf32>
    %46 = arith.addf %44, %45 : vector<32x256xf32>
    %cst_26 = arith.constant 0.000000e+00 : f32
    %47 = vector.broadcast %cst_26 : f32 to vector<32x256xf32>
    %48 = arith.maximumf %46, %47 : vector<32x256xf32>
    %c255_i32_27 = arith.constant 255 : i32
    %49 = tpu.dynamic_rotate %48 by %c255_i32_27 dim 1 : vector<32x256xf32>, i32 -> vector<32x256xf32>
    %50 = arith.maximumf %48, %49 : vector<32x256xf32>
    %cst_28 = arith.constant dense<0.000000e+00> : vector<32x128xf32>
    %51 = tpu.matmul %50, %36, %cst_28 {dimension_numbers = #tpu.dot_dimension_numbers<[1], [0], [0], [1], [0, 0, 1, 1], [], []>} : vector<32x256xf32>, vector<256x128xf32>, vector<32x128xf32> -> vector<32x128xf32>
    %c0_29 = arith.constant 0 : index
    %c0_30 = arith.constant 0 : index
    %52 = vector.load %arg12[%c0_29, %c0_30] : memref<64x96xf32, #tpu.memory_space<vmem>>, vector<64x96xf32>
    %c0_31 = arith.constant 0 : index
    %c0_32 = arith.constant 0 : index
    %53 = vector.load %arg13[%c0_31, %c0_32] : memref<64x1xf32, #tpu.memory_space<vmem>>, vector<64x1xf32>
    %c0_33 = arith.constant 0 : index
    %c0_34 = arith.constant 0 : index
    %54 = vector.load %arg14[%c0_33, %c0_34] : memref<1x128xf32, #tpu.memory_space<vmem>>, vector<1x128xf32>
    %c0_35 = arith.constant 0 : index
    %c0_36 = arith.constant 0 : index
    %55 = vector.load %arg15[%c0_35, %c0_36] : memref<1x128xf32, #tpu.memory_space<vmem>>, vector<1x128xf32>
    %c0_37 = arith.constant 0 : index
    %c0_38 = arith.constant 0 : index
    %56 = vector.load %arg16[%c0_37, %c0_38] : memref<128x64xf32, #tpu.memory_space<vmem>>, vector<128x64xf32>
    %c1_i32_39 = arith.constant 1 : i32
    %57 = tpu.dynamic_rotate %51 by %c1_i32_39 dim 1 : vector<32x128xf32>, i32 -> vector<32x128xf32>
    %58 = vector.broadcast %54 : vector<1x128xf32> to vector<32x128xf32>
    %59 = arith.mulf %57, %58 : vector<32x128xf32>
    %c127_i32 = arith.constant 127 : i32
    %60 = tpu.dynamic_rotate %51 by %c127_i32 dim 1 : vector<32x128xf32>, i32 -> vector<32x128xf32>
    %61 = vector.broadcast %55 : vector<1x128xf32> to vector<32x128xf32>
    %62 = arith.mulf %60, %61 : vector<32x128xf32>
    %63 = tpu.concatenate %59, %51, %62 in 0 : vector<32x128xf32>, vector<32x128xf32>, vector<32x128xf32> -> vector<96x128xf32>
    %cst_40 = arith.constant dense<0.000000e+00> : vector<64x128xf32>
    %64 = tpu.matmul %52, %63, %cst_40 {dimension_numbers = #tpu.dot_dimension_numbers<[1], [0], [0], [1], [0, 0, 1, 1], [], []>} : vector<64x96xf32>, vector<96x128xf32>, vector<64x128xf32> -> vector<64x128xf32>
    %65 = vector.broadcast %53 : vector<64x1xf32> to vector<64x128xf32>
    %66 = arith.addf %64, %65 : vector<64x128xf32>
    %cst_41 = arith.constant 0.000000e+00 : f32
    %67 = vector.broadcast %cst_41 : f32 to vector<64x128xf32>
    %68 = arith.maximumf %66, %67 : vector<64x128xf32>
    %c127_i32_42 = arith.constant 127 : i32
    %69 = tpu.dynamic_rotate %68 by %c127_i32_42 dim 1 : vector<64x128xf32>, i32 -> vector<64x128xf32>
    %70 = arith.maximumf %68, %69 : vector<64x128xf32>
    %cst_43 = arith.constant dense<0.000000e+00> : vector<64x64xf32>
    %71 = tpu.matmul %70, %56, %cst_43 {dimension_numbers = #tpu.dot_dimension_numbers<[1], [0], [0], [1], [0, 0, 1, 1], [], []>} : vector<64x128xf32>, vector<128x64xf32>, vector<64x64xf32> -> vector<64x64xf32>
    %c0_44 = arith.constant 0 : index
    %c0_45 = arith.constant 0 : index
    %72 = vector.load %arg17[%c0_44, %c0_45] : memref<64x8xf32, #tpu.memory_space<vmem>>, vector<64x8xf32>
    %cst_46 = arith.constant dense<0.000000e+00> : vector<64x8xf32>
    %73 = tpu.matmul %71, %72, %cst_46 {dimension_numbers = #tpu.dot_dimension_numbers<[1], [0], [0], [1], [0, 0, 1, 1], [], []>} : vector<64x64xf32>, vector<64x8xf32>, vector<64x8xf32> -> vector<64x8xf32>
    %c0_47 = arith.constant 0 : index
    %c0_48 = arith.constant 0 : index
    %74 = vector.load %arg18[%c0_47, %c0_48] : memref<8x64xf32, #tpu.memory_space<vmem>>, vector<8x64xf32>
    %cst_49 = arith.constant dense<0.000000e+00> : vector<8x8xf32>
    %75 = tpu.matmul %74, %73, %cst_49 {dimension_numbers = #tpu.dot_dimension_numbers<[1], [0], [0], [1], [0, 0, 1, 1], [], []>} : vector<8x64xf32>, vector<64x8xf32>, vector<8x8xf32> -> vector<8x8xf32>
    %c0_50 = arith.constant 0 : index
    %c0_51 = arith.constant 0 : index
    %76 = vector.load %arg19[%c0_50, %c0_51] : memref<8x1xf32, #tpu.memory_space<vmem>>, vector<8x1xf32>
    %77 = vector.broadcast %76 : vector<8x1xf32> to vector<8x8xf32>
    %78 = arith.addf %75, %77 : vector<8x8xf32>
    %79 = vector.shape_cast %78 : vector<8x8xf32> to vector<1x8x8xf32>
    %c0_52 = arith.constant 0 : index
    %c0_53 = arith.constant 0 : index
    %c0_54 = arith.constant 0 : index
    %80 = vector.load %arg20[%c0_52, %c0_53, %c0_54] : memref<1x8x8xf32, #tpu.memory_space<vmem>>, vector<1x8x8xf32>
    tpu.vector_store %arg20[%c0_52, %c0_53, %c0_54], %79 {strides = array<i32>} : memref<1x8x8xf32, #tpu.memory_space<vmem>>, vector<1x8x8xf32>,
    return
  }
  func.func @transform_0(%arg0: i32) -> (i32, i32, i32) {
    %c0_i32 = arith.constant 0 : i32
    %c0_i32_0 = arith.constant 0 : i32
    %c0_i32_1 = arith.constant 0 : i32
    return %arg0, %c0_i32, %c0_i32_0 : i32, i32, i32
  }
  func.func @transform_1(%arg0: i32) -> (i32, i32) {
    %c0_i32 = arith.constant 0 : i32
    %c0_i32_0 = arith.constant 0 : i32
    %c0_i32_1 = arith.constant 0 : i32
    return %c0_i32, %c0_i32_0 : i32, i32
  }
  func.func @transform_2(%arg0: i32) -> (i32, i32) {
    %c0_i32 = arith.constant 0 : i32
    %c0_i32_0 = arith.constant 0 : i32
    %c0_i32_1 = arith.constant 0 : i32
    return %c0_i32, %c0_i32_0 : i32, i32
  }
  func.func @transform_3(%arg0: i32) -> (i32, i32) {
    %c0_i32 = arith.constant 0 : i32
    %c0_i32_0 = arith.constant 0 : i32
    %c0_i32_1 = arith.constant 0 : i32
    return %c0_i32, %c0_i32_0 : i32, i32
  }
  func.func @transform_4(%arg0: i32) -> (i32, i32) {
    %c0_i32 = arith.constant 0 : i32
    %c0_i32_0 = arith.constant 0 : i32
    %c0_i32_1 = arith.constant 0 : i32
    return %c0_i32, %c0_i32_0 : i32, i32
  }
  func.func @transform_5(%arg0: i32) -> (i32, i32) {
    %c0_i32 = arith.constant 0 : i32
    %c0_i32_0 = arith.constant 0 : i32
    %c0_i32_1 = arith.constant 0 : i32
    return %c0_i32, %c0_i32_0 : i32, i32
  }
  func.func @transform_6(%arg0: i32) -> (i32, i32) {
    %c0_i32 = arith.constant 0 : i32
    %c0_i32_0 = arith.constant 0 : i32
    %c0_i32_1 = arith.constant 0 : i32
    return %c0_i32, %c0_i32_0 : i32, i32
  }
  func.func @transform_7(%arg0: i32) -> (i32, i32) {
    %c0_i32 = arith.constant 0 : i32
    %c0_i32_0 = arith.constant 0 : i32
    %c0_i32_1 = arith.constant 0 : i32
    return %c0_i32, %c0_i32_0 : i32, i32
  }
  func.func @transform_8(%arg0: i32) -> (i32, i32) {
    %c0_i32 = arith.constant 0 : i32
    %c0_i32_0 = arith.constant 0 : i32
    %c0_i32_1 = arith.constant 0 : i32
    return %c0_i32, %c0_i32_0 : i32, i32
  }
  func.func @transform_9(%arg0: i32) -> (i32, i32) {
    %c0_i32 = arith.constant 0 : i32
    %c0_i32_0 = arith.constant 0 : i32
    %c0_i32_1 = arith.constant 0 : i32
    return %c0_i32, %c0_i32_0 : i32, i32
  }
  func.func @transform_10(%arg0: i32) -> (i32, i32) {
    %c0_i32 = arith.constant 0 : i32
    %c0_i32_0 = arith.constant 0 : i32
    %c0_i32_1 = arith.constant 0 : i32
    return %c0_i32, %c0_i32_0 : i32, i32
  }
  func.func @transform_11(%arg0: i32) -> (i32, i32) {
    %c0_i32 = arith.constant 0 : i32
    %c0_i32_0 = arith.constant 0 : i32
    %c0_i32_1 = arith.constant 0 : i32
    return %c0_i32, %c0_i32_0 : i32, i32
  }
  func.func @transform_12(%arg0: i32) -> (i32, i32) {
    %c0_i32 = arith.constant 0 : i32
    %c0_i32_0 = arith.constant 0 : i32
    %c0_i32_1 = arith.constant 0 : i32
    return %c0_i32, %c0_i32_0 : i32, i32
  }
  func.func @transform_13(%arg0: i32) -> (i32, i32) {
    %c0_i32 = arith.constant 0 : i32
    %c0_i32_0 = arith.constant 0 : i32
    %c0_i32_1 = arith.constant 0 : i32
    return %c0_i32, %c0_i32_0 : i32, i32
  }
  func.func @transform_14(%arg0: i32) -> (i32, i32) {
    %c0_i32 = arith.constant 0 : i32
    %c0_i32_0 = arith.constant 0 : i32
    %c0_i32_1 = arith.constant 0 : i32
    return %c0_i32, %c0_i32_0 : i32, i32
  }
  func.func @transform_15(%arg0: i32) -> (i32, i32) {
    %c0_i32 = arith.constant 0 : i32
    %c0_i32_0 = arith.constant 0 : i32
    %c0_i32_1 = arith.constant 0 : i32
    return %c0_i32, %c0_i32_0 : i32, i32
  }
  func.func @transform_16(%arg0: i32) -> (i32, i32) {
    %c0_i32 = arith.constant 0 : i32
    %c0_i32_0 = arith.constant 0 : i32
    %c0_i32_1 = arith.constant 0 : i32
    return %c0_i32, %c0_i32_0 : i32, i32
  }
  func.func @transform_17(%arg0: i32) -> (i32, i32) {
    %c0_i32 = arith.constant 0 : i32
    %c0_i32_0 = arith.constant 0 : i32
    %c0_i32_1 = arith.constant 0 : i32
    return %c0_i32, %c0_i32_0 : i32, i32
  }
  func.func @transform_18(%arg0: i32) -> (i32, i32) {
    %c0_i32 = arith.constant 0 : i32
    %c0_i32_0 = arith.constant 0 : i32
    %c0_i32_1 = arith.constant 0 : i32
    return %c0_i32, %c0_i32_0 : i32, i32
  }
  func.func @transform_19(%arg0: i32) -> (i32, i32, i32) {
    %c0_i32 = arith.constant 0 : i32
    %c0_i32_0 = arith.constant 0 : i32
    %c0_i32_1 = arith.constant 0 : i32
    return %arg0, %c0_i32, %c0_i32_0 : i32, i32, i32
  }
}

</mosaic_0001>

<llo_original>
// kernel: tpu_custom_call.1
$region0: #{tpu_custom_call.1}
  #allocation0 [shape = 'u32[]', space=smem, size = 0x4, offset = 0x4, fixed_abs, tag = 'smem constant byte address 0x4 - core index']
  #allocation1 [shape = 'u32[144,128]{1,0:T(1,128)}', space=vmem, size = 0x12000, scoped, tag = 'internal scratch']
  %s0 = inlined_call_operand.vmem [shape: f32[2,1,512], index: 0, kind: input, shape index: {}]
  %s1 = inlined_call_operand.vmem [shape: f32[16,3], index: 1, kind: input, shape index: {}]
  %s2 = inlined_call_operand.vmem [shape: f32[16,1], index: 2, kind: input, shape index: {}]
  %s3 = inlined_call_operand.vmem [shape: f32[1,512], index: 3, kind: input, shape index: {}]
  %s4 = inlined_call_operand.vmem [shape: f32[1,512], index: 4, kind: input, shape index: {}]
  %s5 = inlined_call_operand.hbm [shape: f32[512,256], index: 5, kind: input, shape index: {}]
  %s6 = inlined_call_operand.vmem [shape: f32[32,48], index: 6, kind: input, shape index: {}]
  %s7 = inlined_call_operand.vmem [shape: f32[32,1], index: 7, kind: input, shape index: {}]
  %s8 = inlined_call_operand.hbm [shape: f32[1,256], index: 8, kind: input, shape index: {}]
  %s9 = inlined_call_operand.hbm [shape: f32[1,256], index: 9, kind: input, shape index: {}]
  %s10 = inlined_call_operand.vmem [shape: f32[256,128], index: 10, kind: input, shape index: {}]
  %s11 = inlined_call_operand.vmem [shape: f32[64,96], index: 11, kind: input, shape index: {}]
  %s12 = inlined_call_operand.vmem [shape: f32[64,1], index: 12, kind: input, shape index: {}]
  %s13 = inlined_call_operand.vmem [shape: f32[1,128], index: 13, kind: input, shape index: {}]
  %s14 = inlined_call_operand.vmem [shape: f32[1,128], index: 14, kind: input, shape index: {}]
  %s15 = inlined_call_operand.vmem [shape: f32[128,64], index: 15, kind: input, shape index: {}]
  %s16 = inlined_call_operand.vmem [shape: f32[64,8], index: 16, kind: input, shape index: {}]
  %s17 = inlined_call_operand.vmem [shape: f32[8,64], index: 17, kind: input, shape index: {}]
  %s18 = inlined_call_operand.vmem [shape: f32[8,1], index: 18, kind: input, shape index: {}]
  %s19 = inlined_call_operand.hbm [shape: f32[2,8,8], index: 19, kind: output, shape index: {}]
  %s20 = sld [smem:[#allocation0]]
  $region121: #{tpu_custom_call.1} parent=0
    _
  %s22 = ssub.s32 1, %s20
  %s23 = scalar_select 0, %s22, %s20
  $region1: #{tpu_custom_call.1} parent=0
    #allocation2 [shape = 'u8[524288]{0}', space=vmem, size = 0x80000, scoped, tag = 'input window, operand 5, single buffered']
    #allocation3 [shape = 's32[2]{0}', space=sflag, size = 0x8, scoped, tag = 'scoped memory for tpu_custom_call.1']
    #allocation4 [shape = 's32[2]{0}', space=sflag, size = 0x8, scoped, tag = 'scoped memory for tpu_custom_call.1']
    #allocation5 [shape = 'u8[1024]{0}', space=vmem, size = 0x400, scoped, tag = 'input window, operand 8, single buffered']
    #allocation6 [shape = 's32[1]{0}', space=sflag, size = 0x4, scoped, tag = 'scoped memory for tpu_custom_call.1']
    #allocation7 [shape = 'u8[1024]{0}', space=vmem, size = 0x400, scoped, tag = 'input window, operand 9, single buffered']
    #allocation8 [shape = 'u8[8192]{0}', space=vmem, size = 0x2000, scoped, tag = 'output window, operand 0']
    %24 = vsyncpa [#allocation3], 0
    %25 = vsyncpa [#allocation6], 0
    %26 = vsyncpa [#allocation4], 0
    %s27 = scalar_lea.sflag [#allocation4], 1
    %28 = vsyncpa %s27, 0
    loop: start=0, step=1, limit=4
    $region2: #{tpu_custom_call.1} parent=1 // loop_pre_header
      _
    $region3: #{tpu_custom_call.1} parent=1 // loop_header
      %s30 = sphi 0, %s34
      %p31 = scmp.ge.s32.totalorder %s30, 4
      %s40 = sphi 0, %s42
      %s43 = sphi 0, %s40
      %s44 = sphi 0, %s43
      %s60 = sphi 0, %s44
      %s64 = sphi 0, %s64
      %s66 = sphi 0, %s64
      %s67 = sphi 0, %s66
      %s81 = sphi 0, %s67
      %s85 = sphi 0, %s85
      %s87 = sphi 0, %s85
      %s88 = sphi 0, %s87
      %s102 = sphi 0, %s88
      %s106 = sphi 0, %s106
      %s108 = sphi 0, %s106
      %s109 = sphi 0, %s108
      %s123 = sphi 0, %s109
      %s127 = sphi 0, %s127
      %s129 = sphi 0, %s127
      %s130 = sphi 0, %s129
      %s144 = sphi 0, %s130
      %s148 = sphi 0, %s148
      %s150 = sphi 0, %s148
      %s151 = sphi 0, %s150
      %s165 = sphi 0, %s151
      %s169 = sphi 0, %s169
      %s171 = sphi 0, %s169
      %s172 = sphi 0, %s171
      %s186 = sphi 0, %s172
      %s190 = sphi 0, %s190
      %s192 = sphi 0, %s190
      %s193 = sphi 0, %s192
      %s207 = sphi 0, %s193
      %s211 = sphi 0, %s211
      %s213 = sphi 0, %s211
      %s214 = sphi 0, %s213
      %s228 = sphi 0, %s214
      %s232 = sphi 0, %s232
      %s234 = sphi 0, %s232
      %s235 = sphi 0, %s234
      %s249 = sphi 0, %s235
      %s253 = sphi 0, %s253
      %s255 = sphi 0, %s253
      %s256 = sphi 0, %s255
      %s270 = sphi 0, %s256
      %s274 = sphi 0, %s274
      %s276 = sphi 0, %s274
      %s277 = sphi 0, %s276
      %s291 = sphi 0, %s277
      %s295 = sphi 0, %s295
      %s297 = sphi 0, %s295
      %s298 = sphi 0, %s297
      %s312 = sphi 0, %s298
      %s316 = sphi 0, %s316
      %s318 = sphi 0, %s316
      %s319 = sphi 0, %s318
      %s333 = sphi 0, %s319
      %s337 = sphi 0, %s337
      %s339 = sphi 0, %s337
      %s340 = sphi 0, %s339
      %s354 = sphi 0, %s340
      %s358 = sphi 0, %s358
      %s360 = sphi 0, %s358
      %s361 = sphi 0, %s360
      %s375 = sphi 0, %s361
      %s379 = sphi 0, %s379
      %s381 = sphi 0, %s379
      %s382 = sphi 0, %s381
      %s396 = sphi 0, %s382
      %s400 = sphi 0, %s400
      %s402 = sphi 0, %s400
      %s403 = sphi 0, %s402
      %s417 = sphi 0, %s403
      %s421 = sphi 0, %s421
      %s423 = sphi 0, %s421
      %s424 = sphi 0, %s423
      %s438 = sphi 0, %s424
      %s444 = sphi 0, %s446
      %s447 = sphi 0, %s444
      %s448 = sphi 0, %s447
      %s464 = sphi 0, %s448
    $region4: #{tpu_custom_call.1} parent=1 // loop_header_branch
      %33 = sbr.rel (%p31) target = $region8
    $region5: #{tpu_custom_call.1} parent=1 // loop_body
      %s35 = ssub.s32 %s30, 1
      %s36 = ssub.s32 %s30, 2
      %s37 = sadd.s32 %s30, 1
      %s38 = ssub.s32 %s30, %s37
      %p39 = scmp.eq.s32.totalorder %s38, 0
      %s41 = sadd.s32 %s40, 1
      %s42 = scalar_select %p39, %s40, %s41
      %p45 = pneg %p39
      %p46 = scmp.eq.s32.totalorder %s30, 1
      %p47 = por %p45, %p46
      %p48 = scmp.ne.s32.totalorder %s40, %s43
      %p49 = scmp.eq.s32.totalorder %s30, 0
      %p50 = por %p48, %p49
      %p51 = scmp.ne.s32.totalorder %s40, %s43
      %p52 = scmp.eq.s32.totalorder %s35, 1
      %p53 = por %p51, %p52
      %p54 = scmp.ne.s32.totalorder %s43, %s44
      %p55 = scmp.eq.s32.totalorder %s35, 0
      %p56 = por %p54, %p55
      %p57 = scmp.ne.s32.totalorder %s43, %s44
      %p58 = scmp.eq.s32.totalorder %s36, 1
      %p59 = por %p57, %p58
      %p61 = scmp.ne.s32.totalorder %s44, %s60
      %p62 = scmp.eq.s32.totalorder %s36, 0
      %p63 = por %p61, %p62
      %s65 = sadd.s32 %s64, 1
      %p68 = scmp.eq.s32.totalorder %s30, 1
      %p69 = scmp.ne.s32.totalorder %s64, %s66
      %p70 = scmp.eq.s32.totalorder %s30, 0
      %p71 = por %p69, %p70
      %p72 = scmp.ne.s32.totalorder %s64, %s66
      %p73 = scmp.eq.s32.totalorder %s35, 1
      %p74 = por %p72, %p73
      %p75 = scmp.ne.s32.totalorder %s66, %s67
      %p76 = scmp.eq.s32.totalorder %s35, 0
      %p77 = por %p75, %p76
      %p78 = scmp.ne.s32.totalorder %s66, %s67
      %p79 = scmp.eq.s32.totalorder %s36, 1
      %p80 = por %p78, %p79
      %p82 = scmp.ne.s32.totalorder %s67, %s81
      %p83 = scmp.eq.s32.totalorder %s36, 0
      %p84 = por %p82, %p83
      %s86 = sadd.s32 %s85, 1
      %p89 = scmp.eq.s32.totalorder %s30, 1
      %p90 = scmp.ne.s32.totalorder %s85, %s87
      %p91 = scmp.eq.s32.totalorder %s30, 0
      %p92 = por %p90, %p91
      %p93 = scmp.ne.s32.totalorder %s85, %s87
      %p94 = scmp.eq.s32.totalorder %s35, 1
      %p95 = por %p93, %p94
      %p96 = scmp.ne.s32.totalorder %s87, %s88
      %p97 = scmp.eq.s32.totalorder %s35, 0
      %p98 = por %p96, %p97
      %p99 = scmp.ne.s32.totalorder %s87, %s88
      %p100 = scmp.eq.s32.totalorder %s36, 1
      %p101 = por %p99, %p100
      %p103 = scmp.ne.s32.totalorder %s88, %s102
      %p104 = scmp.eq.s32.totalorder %s36, 0
      %p105 = por %p103, %p104
      %s107 = sadd.s32 %s106, 1
      %p110 = scmp.eq.s32.totalorder %s30, 1
      %p111 = scmp.ne.s32.totalorder %s106, %s108
      %p112 = scmp.eq.s32.totalorder %s30, 0
      %p113 = por %p111, %p112
      %p114 = scmp.ne.s32.totalorder %s106, %s108
      %p115 = scmp.eq.s32.totalorder %s35, 1
      %p116 = por %p114, %p115
      %p117 = scmp.ne.s32.totalorder %s108, %s109
      %p118 = scmp.eq.s32.totalorder %s35, 0
      %p119 = por %p117, %p118
      %p120 = scmp.ne.s32.totalorder %s108, %s109
      %p121 = scmp.eq.s32.totalorder %s36, 1
      %p122 = por %p120, %p121
      %p124 = scmp.ne.s32.totalorder %s109, %s123
      %p125 = scmp.eq.s32.totalorder %s36, 0
      %p126 = por %p124, %p125
      %s128 = sadd.s32 %s127, 1
      %p131 = scmp.eq.s32.totalorder %s30, 1
      %p132 = scmp.ne.s32.totalorder %s127, %s129
      %p133 = scmp.eq.s32.totalorder %s30, 0
      %p134 = por %p132, %p133
      %p135 = scmp.ne.s32.totalorder %s127, %s129
      %p136 = scmp.eq.s32.totalorder %s35, 1
      %p137 = por %p135, %p136
      %p138 = scmp.ne.s32.totalorder %s129, %s130
      %p139 = scmp.eq.s32.totalorder %s35, 0
      %p140 = por %p138, %p139
      %p141 = scmp.ne.s32.totalorder %s129, %s130
      %p142 = scmp.eq.s32.totalorder %s36, 1
      %p143 = por %p141, %p142
      %p145 = scmp.ne.s32.totalorder %s130, %s144
      %p146 = scmp.eq.s32.totalorder %s36, 0
      %p147 = por %p145, %p146
      %s149 = sadd.s32 %s148, 1
      %p152 = scmp.eq.s32.totalorder %s30, 1
      %p153 = scmp.ne.s32.totalorder %s148, %s150
      %p154 = scmp.eq.s32.totalorder %s30, 0
      %p155 = por %p153, %p154
      %p156 = scmp.ne.s32.totalorder %s148, %s150
      %p157 = scmp.eq.s32.totalorder %s35, 1
      %p158 = por %p156, %p157
      %p159 = scmp.ne.s32.totalorder %s150, %s151
      %p160 = scmp.eq.s32.totalorder %s35, 0
      %p161 = por %p159, %p160
      %p162 = scmp.ne.s32.totalorder %s150, %s151
      %p163 = scmp.eq.s32.totalorder %s36, 1
      %p164 = por %p162, %p163
      %p166 = scmp.ne.s32.totalorder %s151, %s165
      %p167 = scmp.eq.s32.totalorder %s36, 0
      %p168 = por %p166, %p167
      %s170 = sadd.s32 %s169, 1
      %p173 = scmp.eq.s32.totalorder %s30, 1
      %p174 = scmp.ne.s32.totalorder %s169, %s171
      %p175 = scmp.eq.s32.totalorder %s30, 0
      %p176 = por %p174, %p175
      %p177 = scmp.ne.s32.totalorder %s169, %s171
      %p178 = scmp.eq.s32.totalorder %s35, 1
      %p179 = por %p177, %p178
      %p180 = scmp.ne.s32.totalorder %s171, %s172
      %p181 = scmp.eq.s32.totalorder %s35, 0
      %p182 = por %p180, %p181
      %p183 = scmp.ne.s32.totalorder %s171, %s172
      %p184 = scmp.eq.s32.totalorder %s36, 1
      %p185 = por %p183, %p184
      %p187 = scmp.ne.s32.totalorder %s172, %s186
      %p188 = scmp.eq.s32.totalorder %s36, 0
      %p189 = por %p187, %p188
      %s191 = sadd.s32 %s190, 1
      %p194 = scmp.eq.s32.totalorder %s30, 1
      %p195 = scmp.ne.s32.totalorder %s190, %s192
      %p196 = scmp.eq.s32.totalorder %s30, 0
      %p197 = por %p195, %p196
      %p198 = scmp.ne.s32.totalorder %s190, %s192
      %p199 = scmp.eq.s32.totalorder %s35, 1
      %p200 = por %p198, %p199
      %p201 = scmp.ne.s32.totalorder %s192, %s193
      %p202 = scmp.eq.s32.totalorder %s35, 0
      %p203 = por %p201, %p202
      %p204 = scmp.ne.s32.totalorder %s192, %s193
      %p205 = scmp.eq.s32.totalorder %s36, 1
      %p206 = por %p204, %p205
      %p208 = scmp.ne.s32.totalorder %s193, %s207
      %p209 = scmp.eq.s32.totalorder %s36, 0
      %p210 = por %p208, %p209
      %s212 = sadd.s32 %s211, 1
      %p215 = scmp.eq.s32.totalorder %s30, 1
      %p216 = scmp.ne.s32.totalorder %s211, %s213
      %p217 = scmp.eq.s32.totalorder %s30, 0
      %p218 = por %p216, %p217
      %p219 = scmp.ne.s32.totalorder %s211, %s213
      %p220 = scmp.eq.s32.totalorder %s35, 1
      %p221 = por %p219, %p220
      %p222 = scmp.ne.s32.totalorder %s213, %s214
      %p223 = scmp.eq.s32.totalorder %s35, 0
      %p224 = por %p222, %p223
      %p225 = scmp.ne.s32.totalorder %s213, %s214
      %p226 = scmp.eq.s32.totalorder %s36, 1
      %p227 = por %p225, %p226
      %p229 = scmp.ne.s32.totalorder %s214, %s228
      %p230 = scmp.eq.s32.totalorder %s36, 0
      %p231 = por %p229, %p230
      %s233 = sadd.s32 %s232, 1
      %p236 = scmp.eq.s32.totalorder %s30, 1
      %p237 = scmp.ne.s32.totalorder %s232, %s234
      %p238 = scmp.eq.s32.totalorder %s30, 0
      %p239 = por %p237, %p238
      %p240 = scmp.ne.s32.totalorder %s232, %s234
      %p241 = scmp.eq.s32.totalorder %s35, 1
      %p242 = por %p240, %p241
      %p243 = scmp.ne.s32.totalorder %s234, %s235
      %p244 = scmp.eq.s32.totalorder %s35, 0
      %p245 = por %p243, %p244
      %p246 = scmp.ne.s32.totalorder %s234, %s235
      %p247 = scmp.eq.s32.totalorder %s36, 1
      %p248 = por %p246, %p247
      %p250 = scmp.ne.s32.totalorder %s235, %s249
      %p251 = scmp.eq.s32.totalorder %s36, 0
      %p252 = por %p250, %p251
      %s254 = sadd.s32 %s253, 1
      %p257 = scmp.eq.s32.totalorder %s30, 1
      %p258 = scmp.ne.s32.totalorder %s253, %s255
      %p259 = scmp.eq.s32.totalorder %s30, 0
      %p260 = por %p258, %p259
      %p261 = scmp.ne.s32.totalorder %s253, %s255
      %p262 = scmp.eq.s32.totalorder %s35, 1
      %p263 = por %p261, %p262
      %p264 = scmp.ne.s32.totalorder %s255, %s256
      %p265 = scmp.eq.s32.totalorder %s35, 0
      %p266 = por %p264, %p265
      %p267 = scmp.ne.s32.totalorder %s255, %s256
      %p268 = scmp.eq.s32.totalorder %s36, 1
      %p269 = por %p267, %p268
      %p271 = scmp.ne.s32.totalorder %s256, %s270
      %p272 = scmp.eq.s32.totalorder %s36, 0
      %p273 = por %p271, %p272
      %s275 = sadd.s32 %s274, 1
      %p278 = scmp.eq.s32.totalorder %s30, 1
      %p279 = scmp.ne.s32.totalorder %s274, %s276
      %p280 = scmp.eq.s32.totalorder %s30, 0
      %p281 = por %p279, %p280
      %p282 = scmp.ne.s32.totalorder %s274, %s276
      %p283 = scmp.eq.s32.totalorder %s35, 1
      %p284 = por %p282, %p283
      %p285 = scmp.ne.s32.totalorder %s276, %s277
      %p286 = scmp.eq.s32.totalorder %s35, 0
      %p287 = por %p285, %p286
      %p288 = scmp.ne.s32.totalorder %s276, %s277
      %p289 = scmp.eq.s32.totalorder %s36, 1
      %p290 = por %p288, %p289
      %p292 = scmp.ne.s32.totalorder %s277, %s291
      %p293 = scmp.eq.s32.totalorder %s36, 0
      %p294 = por %p292, %p293
      %s296 = sadd.s32 %s295, 1
      %p299 = scmp.eq.s32.totalorder %s30, 1
      %p300 = scmp.ne.s32.totalorder %s295, %s297
      %p301 = scmp.eq.s32.totalorder %s30, 0
      %p302 = por %p300, %p301
      %p303 = scmp.ne.s32.totalorder %s295, %s297
      %p304 = scmp.eq.s32.totalorder %s35, 1
      %p305 = por %p303, %p304
      %p306 = scmp.ne.s32.totalorder %s297, %s298
      %p307 = scmp.eq.s32.totalorder %s35, 0
      %p308 = por %p306, %p307
      %p309 = scmp.ne.s32.totalorder %s297, %s298
      %p310 = scmp.eq.s32.totalorder %s36, 1
      %p311 = por %p309, %p310
      %p313 = scmp.ne.s32.totalorder %s298, %s312
      %p314 = scmp.eq.s32.totalorder %s36, 0
      %p315 = por %p313, %p314
      %s317 = sadd.s32 %s316, 1
      %p320 = scmp.eq.s32.totalorder %s30, 1
      %p321 = scmp.ne.s32.totalorder %s316, %s318
      %p322 = scmp.eq.s32.totalorder %s30, 0
      %p323 = por %p321, %p322
      %p324 = scmp.ne.s32.totalorder %s316, %s318
      %p325 = scmp.eq.s32.totalorder %s35, 1
      %p326 = por %p324, %p325
      %p327 = scmp.ne.s32.totalorder %s318, %s319
      %p328 = scmp.eq.s32.totalorder %s35, 0
      %p329 = por %p327, %p328
      %p330 = scmp.ne.s32.totalorder %s318, %s319
      %p331 = scmp.eq.s32.totalorder %s36, 1
      %p332 = por %p330, %p331
      %p334 = scmp.ne.s32.totalorder %s319, %s333
      %p335 = scmp.eq.s32.totalorder %s36, 0
      %p336 = por %p334, %p335
      %s338 = sadd.s32 %s337, 1
      %p341 = scmp.eq.s32.totalorder %s30, 1
      %p342 = scmp.ne.s32.totalorder %s337, %s339
      %p343 = scmp.eq.s32.totalorder %s30, 0
      %p344 = por %p342, %p343
      %p345 = scmp.ne.s32.totalorder %s337, %s339
      %p346 = scmp.eq.s32.totalorder %s35, 1
      %p347 = por %p345, %p346
      %p348 = scmp.ne.s32.totalorder %s339, %s340
      %p349 = scmp.eq.s32.totalorder %s35, 0
      %p350 = por %p348, %p349
      %p351 = scmp.ne.s32.totalorder %s339, %s340
      %p352 = scmp.eq.s32.totalorder %s36, 1
      %p353 = por %p351, %p352
      %p355 = scmp.ne.s32.totalorder %s340, %s354
      %p356 = scmp.eq.s32.totalorder %s36, 0
      %p357 = por %p355, %p356
      %s359 = sadd.s32 %s358, 1
      %p362 = scmp.eq.s32.totalorder %s30, 1
      %p363 = scmp.ne.s32.totalorder %s358, %s360
      %p364 = scmp.eq.s32.totalorder %s30, 0
      %p365 = por %p363, %p364
      %p366 = scmp.ne.s32.totalorder %s358, %s360
      %p367 = scmp.eq.s32.totalorder %s35, 1
      %p368 = por %p366, %p367
      %p369 = scmp.ne.s32.totalorder %s360, %s361
      %p370 = scmp.eq.s32.totalorder %s35, 0
      %p371 = por %p369, %p370
      %p372 = scmp.ne.s32.totalorder %s360, %s361
      %p373 = scmp.eq.s32.totalorder %s36, 1
      %p374 = por %p372, %p373
      %p376 = scmp.ne.s32.totalorder %s361, %s375
      %p377 = scmp.eq.s32.totalorder %s36, 0
      %p378 = por %p376, %p377
      %s380 = sadd.s32 %s379, 1
      %p383 = scmp.eq.s32.totalorder %s30, 1
      %p384 = scmp.ne.s32.totalorder %s379, %s381
      %p385 = scmp.eq.s32.totalorder %s30, 0
      %p386 = por %p384, %p385
      %p387 = scmp.ne.s32.totalorder %s379, %s381
      %p388 = scmp.eq.s32.totalorder %s35, 1
      %p389 = por %p387, %p388
      %p390 = scmp.ne.s32.totalorder %s381, %s382
      %p391 = scmp.eq.s32.totalorder %s35, 0
      %p392 = por %p390, %p391
      %p393 = scmp.ne.s32.totalorder %s381, %s382
      %p394 = scmp.eq.s32.totalorder %s36, 1
      %p395 = por %p393, %p394
      %p397 = scmp.ne.s32.totalorder %s382, %s396
      %p398 = scmp.eq.s32.totalorder %s36, 0
      %p399 = por %p397, %p398
      %s401 = sadd.s32 %s400, 1
      %p404 = scmp.eq.s32.totalorder %s30, 1
      %p405 = scmp.ne.s32.totalorder %s400, %s402
      %p406 = scmp.eq.s32.totalorder %s30, 0
      %p407 = por %p405, %p406
      %p408 = scmp.ne.s32.totalorder %s400, %s402
      %p409 = scmp.eq.s32.totalorder %s35, 1
      %p410 = por %p408, %p409
      %p411 = scmp.ne.s32.totalorder %s402, %s403
      %p412 = scmp.eq.s32.totalorder %s35, 0
      %p413 = por %p411, %p412
      %p414 = scmp.ne.s32.totalorder %s402, %s403
      %p415 = scmp.eq.s32.totalorder %s36, 1
      %p416 = por %p414, %p415
      %p418 = scmp.ne.s32.totalorder %s403, %s417
      %p419 = scmp.eq.s32.totalorder %s36, 0
      %p420 = por %p418, %p419
      %s422 = sadd.s32 %s421, 1
      %p425 = scmp.eq.s32.totalorder %s30, 1
      %p426 = scmp.ne.s32.totalorder %s421, %s423
      %p427 = scmp.eq.s32.totalorder %s30, 0
      %p428 = por %p426, %p427
      %p429 = scmp.ne.s32.totalorder %s421, %s423
      %p430 = scmp.eq.s32.totalorder %s35, 1
      %p431 = por %p429, %p430
      %p432 = scmp.ne.s32.totalorder %s423, %s424
      %p433 = scmp.eq.s32.totalorder %s35, 0
      %p434 = por %p432, %p433
      %p435 = scmp.ne.s32.totalorder %s423, %s424
      %p436 = scmp.eq.s32.totalorder %s36, 1
      %p437 = por %p435, %p436
      %p439 = scmp.ne.s32.totalorder %s424, %s438
      %p440 = scmp.eq.s32.totalorder %s36, 0
      %p441 = por %p439, %p440
      %s442 = ssub.s32 %s30, %s37
      %p443 = scmp.eq.s32.totalorder %s442, 0
      %s445 = sadd.s32 %s444, 1
      %s446 = scalar_select %p443, %s444, %s445
      %p449 = pneg %p443
      %p450 = scmp.eq.s32.totalorder %s30, 1
      %p451 = por %p449, %p450
      %p452 = scmp.ne.s32.totalorder %s444, %s447
      %p453 = scmp.eq.s32.totalorder %s30, 0
      %p454 = por %p452, %p453
      %p455 = scmp.ne.s32.totalorder %s444, %s447
      %p456 = scmp.eq.s32.totalorder %s35, 1
      %p457 = por %p455, %p456
      %p458 = scmp.ne.s32.totalorder %s447, %s448
      %p459 = scmp.eq.s32.totalorder %s35, 0
      %p460 = por %p458, %p459
      %p461 = scmp.ne.s32.totalorder %s447, %s448
      %p462 = scmp.eq.s32.totalorder %s36, 1
      %p463 = por %p461, %p462
      %p465 = scmp.ne.s32.totalorder %s448, %s464
      %p466 = scmp.eq.s32.totalorder %s36, 0
      %p467 = por %p465, %p466
      %p468 = scmp.le.s32.totalorder 1, %s30
      %p469 = scmp.lt.s32.totalorder %s30, 3
      %p470 = pnand %p468, %p469
      %p471 = pneg %p470
      // Predicated region
      $region9: #{tpu_custom_call.1} parent=5 // pred_check
        _
      $region10: #{tpu_custom_call.1} parent=5 // pred_check_branch
        %473 = sbr.rel (%p470) target = $region12
      $region11: #{tpu_custom_call.1} parent=5 // pred_region
        %s474 = ssub.s32 %s30, 1
        // Predicated region
        $region13: #{tpu_custom_call.1} parent=11 // pred_check
          %p475 = pneg %p77
        $region14: #{tpu_custom_call.1} parent=11 // pred_check_branch
          %477 = sbr.rel (%p475) target = $region16
        $region15: #{tpu_custom_call.1} parent=11 // pred_region
          _
        $region16: #{tpu_custom_call.1} parent=11 // pred_fallthru
          _
        // Predicated region
        $region17: #{tpu_custom_call.1} parent=11 // pred_check
          %p478 = pneg %p98
        $region18: #{tpu_custom_call.1} parent=11 // pred_check_branch
          %480 = sbr.rel (%p478) target = $region20
        $region19: #{tpu_custom_call.1} parent=11 // pred_region
          _
        $region20: #{tpu_custom_call.1} parent=11 // pred_fallthru
          _
        // Predicated region
        $region21: #{tpu_custom_call.1} parent=11 // pred_check
          %p481 = pneg %p119
        $region22: #{tpu_custom_call.1} parent=11 // pred_check_branch
          %483 = sbr.rel (%p481) target = $region24
        $region23: #{tpu_custom_call.1} parent=11 // pred_region
          _
        $region24: #{tpu_custom_call.1} parent=11 // pred_fallthru
          _
        // Predicated region
        $region25: #{tpu_custom_call.1} parent=11 // pred_check
          %p484 = pneg %p140
        $region26: #{tpu_custom_call.1} parent=11 // pred_check_branch
          %486 = sbr.rel (%p484) target = $region28
        $region27: #{tpu_custom_call.1} parent=11 // pred_region
          _
        $region28: #{tpu_custom_call.1} parent=11 // pred_fallthru
          _
        // Predicated region
        $region29: #{tpu_custom_call.1} parent=11 // pred_check
          %p487 = pneg %p161
        $region30: #{tpu_custom_call.1} parent=11 // pred_check_branch
          %489 = sbr.rel (%p487) target = $region32
        $region31: #{tpu_custom_call.1} parent=11 // pred_region
          %s491 = ssub.s32 16384, 16384
          %492 = vsyncadd [#allocation3], %s491
          %s493 = sshll.u32 [#allocation2], 4
          %s494 = int_to_ptr.vmem [resolvable:$true] %s493
          %499 = dma.hbm_to_vmem [thread:$0]  %s5, 16384, %s494, [#allocation3], 256, 256, 16
        $region32: #{tpu_custom_call.1} parent=11 // pred_fallthru
          _
        // Predicated region
        $region33: #{tpu_custom_call.1} parent=11 // pred_check
          %p500 = pneg %p182
        $region34: #{tpu_custom_call.1} parent=11 // pred_check_branch
          %502 = sbr.rel (%p500) target = $region36
        $region35: #{tpu_custom_call.1} parent=11 // pred_region
          _
        $region36: #{tpu_custom_call.1} parent=11 // pred_fallthru
          _
        // Predicated region
        $region37: #{tpu_custom_call.1} parent=11 // pred_check
          %p503 = pneg %p203
        $region38: #{tpu_custom_call.1} parent=11 // pred_check_branch
          %505 = sbr.rel (%p503) target = $region40
        $region39: #{tpu_custom_call.1} parent=11 // pred_region
          _
        $region40: #{tpu_custom_call.1} parent=11 // pred_fallthru
          _
        // Predicated region
        $region41: #{tpu_custom_call.1} parent=11 // pred_check
          %p506 = pneg %p224
        $region42: #{tpu_custom_call.1} parent=11 // pred_check_branch
          %508 = sbr.rel (%p506) target = $region44
        $region43: #{tpu_custom_call.1} parent=11 // pred_region
          %s510 = ssub.s32 32, 32
          %511 = vsyncadd [#allocation6], %s510
          %s513 = sshll.u32 [#allocation5], 4
          %s514 = int_to_ptr.vmem [resolvable:$true] %s513
          %516 = dma.hbm_to_vmem [thread:$0]  %s8, 32, %s514, [#allocation6]
        $region44: #{tpu_custom_call.1} parent=11 // pred_fallthru
          _
        // Predicated region
        $region45: #{tpu_custom_call.1} parent=11 // pred_check
          %p517 = pneg %p245
        $region46: #{tpu_custom_call.1} parent=11 // pred_check_branch
          %519 = sbr.rel (%p517) target = $region48
        $region47: #{tpu_custom_call.1} parent=11 // pred_region
          %s521 = ssub.s32 32, 32
          %522 = vsyncadd [#allocation6], %s521
          %s524 = sshll.u32 [#allocation7], 4
          %s525 = int_to_ptr.vmem [resolvable:$true] %s524
          %527 = dma.hbm_to_vmem [thread:$0]  %s9, 32, %s525, [#allocation6]
        $region48: #{tpu_custom_call.1} parent=11 // pred_fallthru
          _
        // Predicated region
        $region49: #{tpu_custom_call.1} parent=11 // pred_check
          %p528 = pneg %p266
        $region50: #{tpu_custom_call.1} parent=11 // pred_check_branch
          %530 = sbr.rel (%p528) target = $region52
        $region51: #{tpu_custom_call.1} parent=11 // pred_region
          _
        $region52: #{tpu_custom_call.1} parent=11 // pred_fallthru
          _
        // Predicated region
        $region53: #{tpu_custom_call.1} parent=11 // pred_check
          %p531 = pneg %p287
        $region54: #{tpu_custom_call.1} parent=11 // pred_check_branch
          %533 = sbr.rel (%p531) target = $region56
        $region55: #{tpu_custom_call.1} parent=11 // pred_region
          _
        $region56: #{tpu_custom_call.1} parent=11 // pred_fallthru
          _
        // Predicated region
        $region57: #{tpu_custom_call.1} parent=11 // pred_check
          %p534 = pneg %p308
        $region58: #{tpu_custom_call.1} parent=11 // pred_check_branch
          %536 = sbr.rel (%p534) target = $region60
        $region59: #{tpu_custom_call.1} parent=11 // pred_region
          _
        $region60: #{tpu_custom_call.1} parent=11 // pred_fallthru
          _
        // Predicated region
        $region61: #{tpu_custom_call.1} parent=11 // pred_check
          %p537 = pneg %p329
        $region62: #{tpu_custom_call.1} parent=11 // pred_check_branch
          %539 = sbr.rel (%p537) target = $region64
        $region63: #{tpu_custom_call.1} parent=11 // pred_region
          _
        $region64: #{tpu_custom_call.1} parent=11 // pred_fallthru
          _
        // Predicated region
        $region65: #{tpu_custom_call.1} parent=11 // pred_check
          %p540 = pneg %p350
        $region66: #{tpu_custom_call.1} parent=11 // pred_check_branch
          %542 = sbr.rel (%p540) target = $region68
        $region67: #{tpu_custom_call.1} parent=11 // pred_region
          _
        $region68: #{tpu_custom_call.1} parent=11 // pred_fallthru
          _
        // Predicated region
        $region69: #{tpu_custom_call.1} parent=11 // pred_check
          %p543 = pneg %p371
        $region70: #{tpu_custom_call.1} parent=11 // pred_check_branch
          %545 = sbr.rel (%p543) target = $region72
        $region71: #{tpu_custom_call.1} parent=11 // pred_region
          _
        $region72: #{tpu_custom_call.1} parent=11 // pred_fallthru
          _
        // Predicated region
        $region73: #{tpu_custom_call.1} parent=11 // pred_check
          %p546 = pneg %p392
        $region74: #{tpu_custom_call.1} parent=11 // pred_check_branch
          %548 = sbr.rel (%p546) target = $region76
        $region75: #{tpu_custom_call.1} parent=11 // pred_region
          _
        $region76: #{tpu_custom_call.1} parent=11 // pred_fallthru
          _
        // Predicated region
        $region77: #{tpu_custom_call.1} parent=11 // pred_check
          %p549 = pneg %p413
        $region78: #{tpu_custom_call.1} parent=11 // pred_check_branch
          %551 = sbr.rel (%p549) target = $region80
        $region79: #{tpu_custom_call.1} parent=11 // pred_region
          _
        $region80: #{tpu_custom_call.1} parent=11 // pred_fallthru
          _
        // Predicated region
        $region81: #{tpu_custom_call.1} parent=11 // pred_check
          %p552 = pneg %p434
        $region82: #{tpu_custom_call.1} parent=11 // pred_check_branch
          %554 = sbr.rel (%p552) target = $region84
        $region83: #{tpu_custom_call.1} parent=11 // pred_region
          _
        $region84: #{tpu_custom_call.1} parent=11 // pred_fallthru
          _
      $region12: #{tpu_custom_call.1} parent=5 // pred_fallthru
        _
      %p555 = scmp.lt.s32.totalorder %s30, 2
      // Predicated region
      $region85: #{tpu_custom_call.1} parent=5 // pred_check
        %p556 = pneg %p555
      $region86: #{tpu_custom_call.1} parent=5 // pred_check_branch
        %558 = sbr.rel (%p556) target = $region88
      $region87: #{tpu_custom_call.1} parent=5 // pred_region
        // Predicated region
        $region89: #{tpu_custom_call.1} parent=87 // pred_check
          %p559 = pneg %p50
        $region90: #{tpu_custom_call.1} parent=87 // pred_check_branch
          %561 = sbr.rel (%p559) target = $region92
        $region91: #{tpu_custom_call.1} parent=87 // pred_region
          %p562 = scmp.lt.s32.totalorder %s30, 1
          %s563 = scalar_select %p562, %s30, 1
          %s564 = smul.addr %s563, 4
          %s565 = scalar_lea.vmem %s0, %s564
        $region92: #{tpu_custom_call.1} parent=87 // pred_fallthru
          _
      $region88: #{tpu_custom_call.1} parent=5 // pred_fallthru
        _
      %p566 = scmp.le.s32.totalorder 1, %s30
      %p567 = scmp.lt.s32.totalorder %s30, 3
      %p568 = pnand %p566, %p567
      %p569 = pneg %p568
      // Predicated region
      $region93: #{tpu_custom_call.1} parent=5 // pred_check
        _
      $region94: #{tpu_custom_call.1} parent=5 // pred_check_branch
        %571 = sbr.rel (%p568) target = $region96
      $region95: #{tpu_custom_call.1} parent=5 // pred_region
        %s572 = ssub.s32 %s30, 1
        // Predicated region
        $region97: #{tpu_custom_call.1} parent=95 // pred_check
          %p573 = pneg %p161
        $region98: #{tpu_custom_call.1} parent=95 // pred_check_branch
          %575 = sbr.rel (%p573) target = $region100
        $region99: #{tpu_custom_call.1} parent=95 // pred_region
          %576 = dma.done [#allocation3], 16384
        $region100: #{tpu_custom_call.1} parent=95 // pred_fallthru
          _
        // Predicated region
        $region101: #{tpu_custom_call.1} parent=95 // pred_check
          %p577 = pneg %p224
        $region102: #{tpu_custom_call.1} parent=95 // pred_check_branch
          %579 = sbr.rel (%p577) target = $region104
        $region103: #{tpu_custom_call.1} parent=95 // pred_region
          %580 = dma.done [#allocation6], 32
        $region104: #{tpu_custom_call.1} parent=95 // pred_fallthru
          _
        // Predicated region
        $region105: #{tpu_custom_call.1} parent=95 // pred_check
          %p581 = pneg %p245
        $region106: #{tpu_custom_call.1} parent=95 // pred_check_branch
          %583 = sbr.rel (%p581) target = $region108
        $region107: #{tpu_custom_call.1} parent=95 // pred_region
          %584 = dma.done [#allocation6], 32
        $region108: #{tpu_custom_call.1} parent=95 // pred_fallthru
          _
        %p585 = scmp.lt.s32.totalorder %s35, 1
        %s586 = scalar_select %p585, %s35, 1
        %s587 = smul.addr %s586, 4
        %s588 = scalar_lea.vmem %s0, %s587
        %p589 = pneg %p56
        %p590 = pneg %p53
        %p591 = pneg %p77
        %p592 = pneg %p74
        %p593 = pneg %p98
        %p594 = pneg %p95
        %p595 = pneg %p119
        %p596 = pneg %p116
        %p597 = pneg %p140
        %p598 = pneg %p137
        %p599 = pneg %p161
        %p600 = pneg %p158
        %p601 = pneg %p182
        %p602 = pneg %p179
        %p603 = pneg %p203
        %p604 = pneg %p200
        %p605 = pneg %p224
        %p606 = pneg %p221
        %p607 = pneg %p245
        %p608 = pneg %p242
        %p609 = pneg %p266
        %p610 = pneg %p263
        %p611 = pneg %p287
        %p612 = pneg %p284
        %p613 = pneg %p308
        %p614 = pneg %p305
        %p615 = pneg %p329
        %p616 = pneg %p326
        %p617 = pneg %p350
        %p618 = pneg %p347
        %p619 = pneg %p371
        %p620 = pneg %p368
        %p621 = pneg %p392
        %p622 = pneg %p389
        %p623 = pneg %p413
        %p624 = pneg %p410
        %p625 = pneg %p434
        %p626 = pneg %p431
        %p627 = pneg %p460
        %p628 = pneg %p457
        %s629 = sand.u32 %s447, 1
        %s630 = scalar_lea.sflag [#allocation4], %s629
        %s631 = sand.u32 %s447, 1
        %s632 = smul.addr %s631, 8
        %s633 = scalar_lea.vmem [#allocation8], %s632
        %p634 = scmp.lt.s32.totalorder %s35, 1
        %s635 = scalar_select %p634, %s35, 1
        %s636 = smul.addr %s635, 4
        %s637 = scalar_lea.vmem %s0, %s636
        %v638 = vld [vmem:[%s637] sm:$0xf]
        %v639 = vld [vmem:[%s1] sm:$0xff]
        %v640 = vld [vmem:[%s1 + $0x8] sm:$0xff]
        %v641 = vld [vmem:[%s2] sm:$0xff]
        %v642 = vld [vmem:[%s2 + $0x8] sm:$0xff]
        %v643 = vld [vmem:[%s3] sm:$0xf]
        %v644 = vld [vmem:[%s4] sm:$0xf]
        %v645 = vld [vmem:[#allocation2] sm:$0xff]
        %v646 = vld [vmem:[#allocation2 + $0x8] sm:$0xff]
        %v647 = vld [vmem:[#allocation2 + $0x10] sm:$0xff]
        %v648 = vld [vmem:[#allocation2 + $0x18] sm:$0xff]
        %v649 = vld [vmem:[#allocation2 + $0x20] sm:$0xff]
        %v650 = vld [vmem:[#allocation2 + $0x28] sm:$0xff]
        %v651 = vld [vmem:[#allocation2 + $0x30] sm:$0xff]
        %v652 = vld [vmem:[#allocation2 + $0x38] sm:$0xff]
        %v653 = vld [vmem:[#allocation2 + $0x40] sm:$0xff]
        %v654 = vld [vmem:[#allocation2 + $0x48] sm:$0xff]
        %v655 = vld [vmem:[#allocation2 + $0x50] sm:$0xff]
        %v656 = vld [vmem:[#allocation2 + $0x58] sm:$0xff]
        %v657 = vld [vmem:[#allocation2 + $0x60] sm:$0xff]
        %v658 = vld [vmem:[#allocation2 + $0x68] sm:$0xff]
        %v659 = vld [vmem:[#allocation2 + $0x70] sm:$0xff]
        %v660 = vld [vmem:[#allocation2 + $0x78] sm:$0xff]
        %v661 = vld [vmem:[#allocation2 + $0x80] sm:$0xff]
        %v662 = vld [vmem:[#allocation2 + $0x88] sm:$0xff]
        %v663 = vld [vmem:[#allocation2 + $0x90] sm:$0xff]
        %v664 = vld [vmem:[#allocation2 + $0x98] sm:$0xff]
        %v665 = vld [vmem:[#allocation2 + $0xa0] sm:$0xff]
        %v666 = vld [vmem:[#allocation2 + $0xa8] sm:$0xff]
        %v667 = vld [vmem:[#allocation2 + $0xb0] sm:$0xff]
        %v668 = vld [vmem:[#allocation2 + $0xb8] sm:$0xff]
        %v669 = vld [vmem:[#allocation2 + $0xc0] sm:$0xff]
        %v670 = vld [vmem:[#allocation2 + $0xc8] sm:$0xff]
        %v671 = vld [vmem:[#allocation2 + $0xd0] sm:$0xff]
        %v672 = vld [vmem:[#allocation2 + $0xd8] sm:$0xff]
        %v673 = vld [vmem:[#allocation2 + $0xe0] sm:$0xff]
        %v674 = vld [vmem:[#allocation2 + $0xe8] sm:$0xff]
        %v675 = vld [vmem:[#allocation2 + $0xf0] sm:$0xff]
        %v676 = vld [vmem:[#allocation2 + $0xf8] sm:$0xff]
        %v677 = vld [vmem:[#allocation2 + $0x100] sm:$0xff]
        %v678 = vld [vmem:[#allocation2 + $0x108] sm:$0xff]
        %v679 = vld [vmem:[#allocation2 + $0x110] sm:$0xff]
        %v680 = vld [vmem:[#allocation2 + $0x118] sm:$0xff]
        %v681 = vld [vmem:[#allocation2 + $0x120] sm:$0xff]
        %v682 = vld [vmem:[#allocation2 + $0x128] sm:$0xff]
        %v683 = vld [vmem:[#allocation2 + $0x130] sm:$0xff]
        %v684 = vld [vmem:[#allocation2 + $0x138] sm:$0xff]
        %v685 = vld [vmem:[#allocation2 + $0x140] sm:$0xff]
        %v686 = vld [vmem:[#allocation2 + $0x148] sm:$0xff]
        %v687 = vld [vmem:[#allocation2 + $0x150] sm:$0xff]
        %v688 = vld [vmem:[#allocation2 + $0x158] sm:$0xff]
        %v689 = vld [vmem:[#allocation2 + $0x160] sm:$0xff]
        %v690 = vld [vmem:[#allocation2 + $0x168] sm:$0xff]
        %v691 = vld [vmem:[#allocation2 + $0x170] sm:$0xff]
        %v692 = vld [vmem:[#allocation2 + $0x178] sm:$0xff]
        %v693 = vld [vmem:[#allocation2 + $0x180] sm:$0xff]
        %v694 = vld [vmem:[#allocation2 + $0x188] sm:$0xff]
        %v695 = vld [vmem:[#allocation2 + $0x190] sm:$0xff]
        %v696 = vld [vmem:[#allocation2 + $0x198] sm:$0xff]
        %v697 = vld [vmem:[#allocation2 + $0x1a0] sm:$0xff]
        %v698 = vld [vmem:[#allocation2 + $0x1a8] sm:$0xff]
        %v699 = vld [vmem:[#allocation2 + $0x1b0] sm:$0xff]
        %v700 = vld [vmem:[#allocation2 + $0x1b8] sm:$0xff]
        %v701 = vld [vmem:[#allocation2 + $0x1c0] sm:$0xff]
        %v702 = vld [vmem:[#allocation2 + $0x1c8] sm:$0xff]
        %v703 = vld [vmem:[#allocation2 + $0x1d0] sm:$0xff]
        %v704 = vld [vmem:[#allocation2 + $0x1d8] sm:$0xff]
        %v705 = vld [vmem:[#allocation2 + $0x1e0] sm:$0xff]
        %v706 = vld [vmem:[#allocation2 + $0x1e8] sm:$0xff]
        %v707 = vld [vmem:[#allocation2 + $0x1f0] sm:$0xff]
        %v708 = vld [vmem:[#allocation2 + $0x1f8] sm:$0xff]
        %v709 = vld [vmem:[#allocation2 + $0x200] sm:$0xff]
        %v710 = vld [vmem:[#allocation2 + $0x208] sm:$0xff]
        %v711 = vld [vmem:[#allocation2 + $0x210] sm:$0xff]
        %v712 = vld [vmem:[#allocation2 + $0x218] sm:$0xff]
        %v713 = vld [vmem:[#allocation2 + $0x220] sm:$0xff]
        %v714 = vld [vmem:[#allocation2 + $0x228] sm:$0xff]
        %v715 = vld [vmem:[#allocation2 + $0x230] sm:$0xff]
        %v716 = vld [vmem:[#allocation2 + $0x238] sm:$0xff]
        %v717 = vld [vmem:[#allocation2 + $0x240] sm:$0xff]
        %v718 = vld [vmem:[#allocation2 + $0x248] sm:$0xff]
        %v719 = vld [vmem:[#allocation2 + $0x250] sm:$0xff]
        %v720 = vld [vmem:[#allocation2 + $0x258] sm:$0xff]
        %v721 = vld [vmem:[#allocation2 + $0x260] sm:$0xff]
        %v722 = vld [vmem:[#allocation2 + $0x268] sm:$0xff]
        %v723 = vld [vmem:[#allocation2 + $0x270] sm:$0xff]
        %v724 = vld [vmem:[#allocation2 + $0x278] sm:$0xff]
        %v725 = vld [vmem:[#allocation2 + $0x280] sm:$0xff]
        %v726 = vld [vmem:[#allocation2 + $0x288] sm:$0xff]
        %v727 = vld [vmem:[#allocation2 + $0x290] sm:$0xff]
        %v728 = vld [vmem:[#allocation2 + $0x298] sm:$0xff]
        %v729 = vld [vmem:[#allocation2 + $0x2a0] sm:$0xff]
        %v730 = vld [vmem:[#allocation2 + $0x2a8] sm:$0xff]
        %v731 = vld [vmem:[#allocation2 + $0x2b0] sm:$0xff]
        %v732 = vld [vmem:[#allocation2 + $0x2b8] sm:$0xff]
        %v733 = vld [vmem:[#allocation2 + $0x2c0] sm:$0xff]
        %v734 = vld [vmem:[#allocation2 + $0x2c8] sm:$0xff]
        %v735 = vld [vmem:[#allocation2 + $0x2d0] sm:$0xff]
        %v736 = vld [vmem:[#allocation2 + $0x2d8] sm:$0xff]
        %v737 = vld [vmem:[#allocation2 + $0x2e0] sm:$0xff]
        %v738 = vld [vmem:[#allocation2 + $0x2e8] sm:$0xff]
        %v739 = vld [vmem:[#allocation2 + $0x2f0] sm:$0xff]
        %v740 = vld [vmem:[#allocation2 + $0x2f8] sm:$0xff]
        %v741 = vld [vmem:[#allocation2 + $0x300] sm:$0xff]
        %v742 = vld [vmem:[#allocation2 + $0x308] sm:$0xff]
        %v743 = vld [vmem:[#allocation2 + $0x310] sm:$0xff]
        %v744 = vld [vmem:[#allocation2 + $0x318] sm:$0xff]
        %v745 = vld [vmem:[#allocation2 + $0x320] sm:$0xff]
        %v746 = vld [vmem:[#allocation2 + $0x328] sm:$0xff]
        %v747 = vld [vmem:[#allocation2 + $0x330] sm:$0xff]
        %v748 = vld [vmem:[#allocation2 + $0x338] sm:$0xff]
        %v749 = vld [vmem:[#allocation2 + $0x340] sm:$0xff]
        %v750 = vld [vmem:[#allocation2 + $0x348] sm:$0xff]
        %v751 = vld [vmem:[#allocation2 + $0x350] sm:$0xff]
        %v752 = vld [vmem:[#allocation2 + $0x358] sm:$0xff]
        %v753 = vld [vmem:[#allocation2 + $0x360] sm:$0xff]
        %v754 = vld [vmem:[#allocation2 + $0x368] sm:$0xff]
        %v755 = vld [vmem:[#allocation2 + $0x370] sm:$0xff]
        %v756 = vld [vmem:[#allocation2 + $0x378] sm:$0xff]
        %v757 = vld [vmem:[#allocation2 + $0x380] sm:$0xff]
        %v758 = vld [vmem:[#allocation2 + $0x388] sm:$0xff]
        %v759 = vld [vmem:[#allocation2 + $0x390] sm:$0xff]
        %v760 = vld [vmem:[#allocation2 + $0x398] sm:$0xff]
        %v761 = vld [vmem:[#allocation2 + $0x3a0] sm:$0xff]
        %v762 = vld [vmem:[#allocation2 + $0x3a8] sm:$0xff]
        %v763 = vld [vmem:[#allocation2 + $0x3b0] sm:$0xff]
        %v764 = vld [vmem:[#allocation2 + $0x3b8] sm:$0xff]
        %v765 = vld [vmem:[#allocation2 + $0x3c0] sm:$0xff]
        %v766 = vld [vmem:[#allocation2 + $0x3c8] sm:$0xff]
        %v767 = vld [vmem:[#allocation2 + $0x3d0] sm:$0xff]
        %v768 = vld [vmem:[#allocation2 + $0x3d8] sm:$0xff]
        %v769 = vld [vmem:[#allocation2 + $0x3e0] sm:$0xff]
        %v770 = vld [vmem:[#allocation2 + $0x3e8] sm:$0xff]
        %v771 = vld [vmem:[#allocation2 + $0x3f0] sm:$0xff]
        %v772 = vld [vmem:[#allocation2 + $0x3f8] sm:$0xff]
        %v774 = vlaneseq
        %v775 = vshrl.u32 %v774, 7
        %v776 = vsub.s32 0, %v775
        %v777 = vrot.slane %v638, %v776
        %v778 = vlaneseq
        %v779 = vshrl.u32 %v778, 7
        %v780 = vsub.s32 1, %v779
        %v781 = vrot.slane %v638, %v780
        %v782 = vlaneseq
        %v783 = vshrl.u32 %v782, 7
        %v784 = vsub.s32 2, %v783
        %v785 = vrot.slane %v638, %v784
        %v786 = vlaneseq
        %v787 = vshrl.u32 %v786, 7
        %v788 = vsub.s32 3, %v787
        %v789 = vrot.slane %v638, %v788
        %794 = vrot.lane.b32.xlu0 %v777, 1
        %v795 = vpop.permute.xlu0 %794
        %796 = vrot.lane.b32.xlu0 %v781, 1
        %v797 = vpop.permute.xlu0 %796
        %798 = vrot.lane.b32.xlu0 %v785, 1
        %v799 = vpop.permute.xlu0 %798
        %800 = vrot.lane.b32.xlu0 %v789, 1
        %v801 = vpop.permute.xlu0 %800
        %v802 = vlaneseq
        %v803 = vand.u32 %v802, 127
        %vm804 = vcmp.lt.s32.totalorder %v803, 1
        %v805 = vsel %vm804, %v799, %v801
        %v806 = vsel %vm804, %v797, %v799
        %v807 = vsel %vm804, %v795, %v797
        %v808 = vsel %vm804, %v801, %v795
        %v810 = vlaneseq
        %v811 = vshrl.u32 %v810, 7
        %v812 = vsub.s32 0, %v811
        %v813 = vrot.slane %v643, %v812
        %v814 = vlaneseq
        %v815 = vshrl.u32 %v814, 7
        %v816 = vsub.s32 1, %v815
        %v817 = vrot.slane %v643, %v816
        %v818 = vlaneseq
        %v819 = vshrl.u32 %v818, 7
        %v820 = vsub.s32 2, %v819
        %v821 = vrot.slane %v643, %v820
        %v822 = vlaneseq
        %v823 = vshrl.u32 %v822, 7
        %v824 = vsub.s32 3, %v823
        %v825 = vrot.slane %v643, %v824
        %v830 = vmul.f32 %v808, %v813
        %v831 = vmul.f32 %v807, %v817
        %v832 = vmul.f32 %v806, %v821
        %v833 = vmul.f32 %v805, %v825
        %834 = vrot.lane.b32.xlu0 %v777, 127
        %v835 = vpop.permute.xlu0 %834
        %836 = vrot.lane.b32.xlu0 %v781, 127
        %v837 = vpop.permute.xlu0 %836
        %838 = vrot.lane.b32.xlu0 %v785, 127
        %v839 = vpop.permute.xlu0 %838
        %840 = vrot.lane.b32.xlu0 %v789, 127
        %v841 = vpop.permute.xlu0 %840
        %vm842 = vcmp.lt.s32.totalorder %v803, 127
        %v843 = vsel %vm842, %v839, %v841
        %v844 = vsel %vm842, %v837, %v839
        %v845 = vsel %vm842, %v835, %v837
        %v846 = vsel %vm842, %v841, %v835
        %v848 = vlaneseq
        %v849 = vshrl.u32 %v848, 7
        %v850 = vsub.s32 0, %v849
        %v851 = vrot.slane %v644, %v850
        %v852 = vlaneseq
        %v853 = vshrl.u32 %v852, 7
        %v854 = vsub.s32 1, %v853
        %v855 = vrot.slane %v644, %v854
        %v856 = vlaneseq
        %v857 = vshrl.u32 %v856, 7
        %v858 = vsub.s32 2, %v857
        %v859 = vrot.slane %v644, %v858
        %v860 = vlaneseq
        %v861 = vshrl.u32 %v860, 7
        %v862 = vsub.s32 3, %v861
        %v863 = vrot.slane %v644, %v862
        %v868 = vmul.f32 %v845, %v851
        %v869 = vmul.f32 %v844, %v855
        %v870 = vmul.f32 %v843, %v859
        %v871 = vmul.f32 %v846, %v863
        %873 = vset.pattern.permute.xlu0 0
        %874 = vperm.xlu0 %873, %v639
        %v875 = vpop.permute.xlu0 %874
        %878 = vset.pattern.permute.xlu0 0
        %879 = vperm.xlu0 %878, %v640
        %v880 = vpop.permute.xlu0 %879
        %v882 = vlaneseq
        %v883 = vshrl.u32 %v882, 7
        %v884 = vsub.s32 0, %v883
        %v885 = vrot.slane %v830, %v884
        %v886 = vlaneseq
        %v887 = vshrl.u32 %v886, 7
        %v888 = vsub.s32 0, %v887
        %v889 = vrot.slane %v831, %v888
        %v890 = vlaneseq
        %v891 = vshrl.u32 %v890, 7
        %v892 = vsub.s32 0, %v891
        %v893 = vrot.slane %v832, %v892
        %v894 = vlaneseq
        %v895 = vshrl.u32 %v894, 7
        %v896 = vsub.s32 0, %v895
        %v897 = vrot.slane %v833, %v896
        %v898 = vmul.f32 %v875, %v885
        %v899 = vmul.f32 %v875, %v889
        %v900 = vmul.f32 %v875, %v893
        %v901 = vmul.f32 %v875, %v897
        %v902 = vmul.f32 %v880, %v885
        %v903 = vmul.f32 %v880, %v889
        %v904 = vmul.f32 %v880, %v893
        %v905 = vmul.f32 %v880, %v897
        %906 = vset.pattern.permute.xlu0 1
        %907 = vperm.xlu0 %906, %v639
        %v908 = vpop.permute.xlu0 %907
        %910 = vset.pattern.permute.xlu0 1
        %911 = vperm.xlu0 %910, %v640
        %v912 = vpop.permute.xlu0 %911
        %v914 = vmul.f32 %v908, %v777
        %v915 = vmul.f32 %v908, %v781
        %v916 = vmul.f32 %v908, %v785
        %v917 = vmul.f32 %v908, %v789
        %v918 = vmul.f32 %v912, %v777
        %v919 = vmul.f32 %v912, %v781
        %v920 = vmul.f32 %v912, %v785
        %v921 = vmul.f32 %v912, %v789
        %v922 = vadd.f32 %v898, %v914
        %v923 = vadd.f32 %v899, %v915
        %v924 = vadd.f32 %v900, %v916
        %v925 = vadd.f32 %v901, %v917
        %v926 = vadd.f32 %v902, %v918
        %v927 = vadd.f32 %v903, %v919
        %v928 = vadd.f32 %v904, %v920
        %v929 = vadd.f32 %v905, %v921
        %930 = vset.pattern.permute.xlu0 2
        %931 = vperm.xlu0 %930, %v639
        %v932 = vpop.permute.xlu0 %931
        %934 = vset.pattern.permute.xlu0 2
        %935 = vperm.xlu0 %934, %v640
        %v936 = vpop.permute.xlu0 %935
        %v938 = vlaneseq
        %v939 = vshrl.u32 %v938, 7
        %v940 = vsub.s32 0, %v939
        %v941 = vrot.slane %v868, %v940
        %v942 = vlaneseq
        %v943 = vshrl.u32 %v942, 7
        %v944 = vsub.s32 0, %v943
        %v945 = vrot.slane %v869, %v944
        %v946 = vlaneseq
        %v947 = vshrl.u32 %v946, 7
        %v948 = vsub.s32 0, %v947
        %v949 = vrot.slane %v870, %v948
        %v950 = vlaneseq
        %v951 = vshrl.u32 %v950, 7
        %v952 = vsub.s32 0, %v951
        %v953 = vrot.slane %v871, %v952
        %v954 = vmul.f32 %v932, %v941
        %v955 = vmul.f32 %v932, %v945
        %v956 = vmul.f32 %v932, %v949
        %v957 = vmul.f32 %v932, %v953
        %v958 = vmul.f32 %v936, %v941
        %v959 = vmul.f32 %v936, %v945
        %v960 = vmul.f32 %v936, %v949
        %v961 = vmul.f32 %v936, %v953
        %v962 = vadd.f32 %v922, %v954
        %v963 = vadd.f32 %v923, %v955
        %v964 = vadd.f32 %v924, %v956
        %v965 = vadd.f32 %v925, %v957
        %v966 = vadd.f32 %v926, %v958
        %v967 = vadd.f32 %v927, %v959
        %v968 = vadd.f32 %v928, %v960
        %v969 = vadd.f32 %v929, %v961
        %971 = vset.pattern.permute.xlu0 0
        %972 = vperm.xlu0 %971, %v641
        %v973 = vpop.permute.xlu0 %972
        %976 = vset.pattern.permute.xlu0 0
        %977 = vperm.xlu0 %976, %v642
        %v978 = vpop.permute.xlu0 %977
        %v980 = vadd.f32 %v962, %v973
        %v981 = vadd.f32 %v963, %v973
        %v982 = vadd.f32 %v964, %v973
        %v983 = vadd.f32 %v965, %v973
        %v984 = vadd.f32 %v966, %v978
        %v985 = vadd.f32 %v967, %v978
        %v986 = vadd.f32 %v968, %v978
        %v987 = vadd.f32 %v969, %v978
        %v988 = vmax.f32 %v980, 0.0
        %v989 = vmax.f32 %v981, 0.0
        %v990 = vmax.f32 %v982, 0.0
        %v991 = vmax.f32 %v983, 0.0
        %v992 = vmax.f32 %v984, 0.0
        %v993 = vmax.f32 %v985, 0.0
        %v994 = vmax.f32 %v986, 0.0
        %v995 = vmax.f32 %v987, 0.0
        %996 = vrot.lane.b32.xlu0 %v988, 127
        %v997 = vpop.permute.xlu0 %996
        %998 = vrot.lane.b32.xlu0 %v992, 127
        %v999 = vpop.permute.xlu0 %998
        %1000 = vrot.lane.b32.xlu0 %v989, 127
        %v1001 = vpop.permute.xlu0 %1000
        %1002 = vrot.lane.b32.xlu0 %v993, 127
        %v1003 = vpop.permute.xlu0 %1002
        %1004 = vrot.lane.b32.xlu0 %v990, 127
        %v1005 = vpop.permute.xlu0 %1004
        %1006 = vrot.lane.b32.xlu0 %v994, 127
        %v1007 = vpop.permute.xlu0 %1006
        %1008 = vrot.lane.b32.xlu0 %v991, 127
        %v1009 = vpop.permute.xlu0 %1008
        %1010 = vrot.lane.b32.xlu0 %v995, 127
        %v1011 = vpop.permute.xlu0 %1010
        %v1012 = vsel %vm842, %v1005, %v1009
        %v1013 = vsel %vm842, %v1007, %v1011
        %v1014 = vsel %vm842, %v1001, %v1005
        %v1015 = vsel %vm842, %v1003, %v1007
        %v1016 = vsel %vm842, %v997, %v1001
        %v1017 = vsel %vm842, %v999, %v1003
        %v1018 = vsel %vm842, %v1009, %v997
        %v1019 = vsel %vm842, %v1011, %v999
        %v1020 = vmax.f32 %v988, %v1016
        %v1021 = vmax.f32 %v989, %v1014
        %v1022 = vmax.f32 %v990, %v1012
        %v1023 = vmax.f32 %v991, %v1018
        %v1024 = vmax.f32 %v992, %v1017
        %v1025 = vmax.f32 %v993, %v1015
        %v1026 = vmax.f32 %v994, %v1013
        %v1027 = vmax.f32 %v995, %v1019
        %1028 = vmatprep.subr.mxu0 %v646
        %1029 = vmatpush1.msra.mxu0 %v645
        %1030 = vmatprep.subr.mxu0 %v648
        %1031 = vmatpush1.msra.mxu0 %v647
        %1032 = vmatprep.subr.mxu0 %v650
        %1033 = vmatpush1.msra.mxu0 %v649
        %1034 = vmatprep.subr.mxu0 %v652
        %1035 = vmatpush1.msra.mxu0 %v651
        %1036 = vmatprep.subr.mxu0 %v654
        %1037 = vmatpush1.msra.mxu0 %v653
        %1038 = vmatprep.subr.mxu0 %v656
        %1039 = vmatpush1.msra.mxu0 %v655
        %1040 = vmatprep.subr.mxu0 %v658
        %1041 = vmatpush1.msra.mxu0 %v657
        %1042 = vmatprep.subr.mxu0 %v660
        %1043 = vmatpush1.msra.mxu0 %v659
        %1044 = vmatprep.subr.mxu0 %v662
        %1045 = vmatpush1.msra.mxu0 %v661
        %1046 = vmatprep.subr.mxu0 %v664
        %1047 = vmatpush1.msra.mxu0 %v663
        %1048 = vmatprep.subr.mxu0 %v666
        %1049 = vmatpush1.msra.mxu0 %v665
        %1050 = vmatprep.subr.mxu0 %v668
        %1051 = vmatpush1.msra.mxu0 %v667
        %1052 = vmatprep.subr.mxu0 %v670
        %1053 = vmatpush1.msra.mxu0 %v669
        %1054 = vmatprep.subr.mxu0 %v672
        %1055 = vmatpush1.msra.mxu0 %v671
        %1056 = vmatprep.subr.mxu0 %v674
        %1057 = vmatpush1.msra.mxu0 %v673
        %1058 = vmatprep.subr.mxu0 %v676
        %1059 = vmatpush1.msra.mxu0 %v675
        %1060 = vmatprep.subr.mxu0 %v678
        %1061 = vmatpush1.msra.mxu0 %v677
        %1062 = vmatprep.subr.mxu0 %v680
        %1063 = vmatpush1.msra.mxu0 %v679
        %1064 = vmatprep.subr.mxu0 %v682
        %1065 = vmatpush1.msra.mxu0 %v681
        %1066 = vmatprep.subr.mxu0 %v684
        %1067 = vmatpush1.msra.mxu0 %v683
        %1068 = vmatprep.subr.mxu0 %v686
        %1069 = vmatpush1.msra.mxu0 %v685
        %1070 = vmatprep.subr.mxu0 %v688
        %1071 = vmatpush1.msra.mxu0 %v687
        %1072 = vmatprep.subr.mxu0 %v690
        %1073 = vmatpush1.msra.mxu0 %v689
        %1074 = vmatprep.subr.mxu0 %v692
        %1075 = vmatpush1.msra.mxu0 %v691
        %1076 = vmatprep.subr.mxu0 %v694
        %1077 = vmatpush1.msra.mxu0 %v693
        %1078 = vmatprep.subr.mxu0 %v696
        %1079 = vmatpush1.msra.mxu0 %v695
        %1080 = vmatprep.subr.mxu0 %v698
        %1081 = vmatpush1.msra.mxu0 %v697
        %1082 = vmatprep.subr.mxu0 %v700
        %1083 = vmatpush1.msra.mxu0 %v699
        %1084 = vmatprep.subr.mxu0 %v702
        %1085 = vmatpush1.msra.mxu0 %v701
        %1086 = vmatprep.subr.mxu0 %v704
        %1087 = vmatpush1.msra.mxu0 %v703
        %1088 = vmatprep.subr.mxu0 %v706
        %1089 = vmatpush1.msra.mxu0 %v705
        %1090 = vmatprep.subr.mxu0 %v708
        %1091 = vmatpush1.msra.mxu0 %v707
        %1092 = vmatprep.mubr.f32.mxu0 %v1021
        %1093 = vmatmul.mubr.f32.gmra.mrb[0].mxu0 %v1020
        %v1094 = vpop.f32.mrb[0].mxu0
        %v1095 = vadd.f32 0.0, %v1094
        %v1096 = vpop.f32.mrb[0].mxu0
        %v1097 = vadd.f32 0.0, %v1096
        %1098 = vmatprep.mubr.f32.mxu0 %v1025
        %1099 = vmatmul.mubr.f32.gmra.mrb[0].mxu0 %v1024
        %v1100 = vpop.f32.mrb[0].mxu0
        %v1101 = vadd.f32 0.0, %v1100
        %v1102 = vpop.f32.mrb[0].mxu0
        %v1103 = vadd.f32 0.0, %v1102
        %1104 = vdwg.mxu0
        %1105 = vmatprep.subr.mxu0 %v710
        %1106 = vmatpush1.msra.mxu0 %v709
        %1107 = vmatprep.subr.mxu0 %v712
        %1108 = vmatpush1.msra.mxu0 %v711
        %1109 = vmatprep.subr.mxu0 %v714
        %1110 = vmatpush1.msra.mxu0 %v713
        %1111 = vmatprep.subr.mxu0 %v716
        %1112 = vmatpush1.msra.mxu0 %v715
        %1113 = vmatprep.subr.mxu0 %v718
        %1114 = vmatpush1.msra.mxu0 %v717
        %1115 = vmatprep.subr.mxu0 %v720
        %1116 = vmatpush1.msra.mxu0 %v719
        %1117 = vmatprep.subr.mxu0 %v722
        %1118 = vmatpush1.msra.mxu0 %v721
        %1119 = vmatprep.subr.mxu0 %v724
        %1120 = vmatpush1.msra.mxu0 %v723
        %1121 = vmatprep.subr.mxu0 %v726
        %1122 = vmatpush1.msra.mxu0 %v725
        %1123 = vmatprep.subr.mxu0 %v728
        %1124 = vmatpush1.msra.mxu0 %v727
        %1125 = vmatprep.subr.mxu0 %v730
        %1126 = vmatpush1.msra.mxu0 %v729
        %1127 = vmatprep.subr.mxu0 %v732
        %1128 = vmatpush1.msra.mxu0 %v731
        %1129 = vmatprep.subr.mxu0 %v734
        %1130 = vmatpush1.msra.mxu0 %v733
        %1131 = vmatprep.subr.mxu0 %v736
        %1132 = vmatpush1.msra.mxu0 %v735
        %1133 = vmatprep.subr.mxu0 %v738
        %1134 = vmatpush1.msra.mxu0 %v737
        %1135 = vmatprep.subr.mxu0 %v740
        %1136 = vmatpush1.msra.mxu0 %v739
        %1137 = vmatprep.subr.mxu0 %v742
        %1138 = vmatpush1.msra.mxu0 %v741
        %1139 = vmatprep.subr.mxu0 %v744
        %1140 = vmatpush1.msra.mxu0 %v743
        %1141 = vmatprep.subr.mxu0 %v746
        %1142 = vmatpush1.msra.mxu0 %v745
        %1143 = vmatprep.subr.mxu0 %v748
        %1144 = vmatpush1.msra.mxu0 %v747
        %1145 = vmatprep.subr.mxu0 %v750
        %1146 = vmatpush1.msra.mxu0 %v749
        %1147 = vmatprep.subr.mxu0 %v752
        %1148 = vmatpush1.msra.mxu0 %v751
        %1149 = vmatprep.subr.mxu0 %v754
        %1150 = vmatpush1.msra.mxu0 %v753
        %1151 = vmatprep.subr.mxu0 %v756
        %1152 = vmatpush1.msra.mxu0 %v755
        %1153 = vmatprep.subr.mxu0 %v758
        %1154 = vmatpush1.msra.mxu0 %v757
        %1155 = vmatprep.subr.mxu0 %v760
        %1156 = vmatpush1.msra.mxu0 %v759
        %1157 = vmatprep.subr.mxu0 %v762
        %1158 = vmatpush1.msra.mxu0 %v761
        %1159 = vmatprep.subr.mxu0 %v764
        %1160 = vmatpush1.msra.mxu0 %v763
        %1161 = vmatprep.subr.mxu0 %v766
        %1162 = vmatpush1.msra.mxu0 %v765
        %1163 = vmatprep.subr.mxu0 %v768
        %1164 = vmatpush1.msra.mxu0 %v767
        %1165 = vmatprep.subr.mxu0 %v770
        %1166 = vmatpush1.msra.mxu0 %v769
        %1167 = vmatprep.subr.mxu0 %v772
        %1168 = vmatpush1.msra.mxu0 %v771
        %1169 = vmatprep.mubr.f32.mxu0 %v1023
        %1170 = vmatmul.mubr.f32.gmra.mrb[0].mxu0 %v1022
        %v1171 = vpop.f32.mrb[0].mxu0
        %v1172 = vadd.f32 %v1095, %v1171
        %v1173 = vpop.f32.mrb[0].mxu0
        %v1174 = vadd.f32 %v1097, %v1173
        %1175 = vmatprep.mubr.f32.mxu0 %v1027
        %1176 = vmatmul.mubr.f32.gmra.mrb[0].mxu0 %v1026
        %v1177 = vpop.f32.mrb[0].mxu0
        %v1178 = vadd.f32 %v1101, %v1177
        %v1179 = vpop.f32.mrb[0].mxu0
        %v1180 = vadd.f32 %v1103, %v1179
        %1181 = vdwg.mxu0
        %v1182 = vld [vmem:[%s6] sm:$0xff]
        %v1183 = vld [vmem:[%s6 + $0x8] sm:$0xff]
        %v1184 = vld [vmem:[%s6 + $0x10] sm:$0xff]
        %v1185 = vld [vmem:[%s6 + $0x18] sm:$0xff]
        %v1186 = vld [vmem:[%s7] sm:$0xff]
        %v1187 = vld [vmem:[%s7 + $0x8] sm:$0xff]
        %v1188 = vld [vmem:[%s7 + $0x10] sm:$0xff]
        %v1189 = vld [vmem:[%s7 + $0x18] sm:$0xff]
        %v1190 = vld [vmem:[#allocation5] sm:$0x3]
        %v1191 = vld [vmem:[#allocation7] sm:$0x3]
        %v1192 = vld [vmem:[%s10] sm:$0xff]
        %v1193 = vld [vmem:[%s10 + $0x8] sm:$0xff]
        %v1194 = vld [vmem:[%s10 + $0x10] sm:$0xff]
        %v1195 = vld [vmem:[%s10 + $0x18] sm:$0xff]
        %v1196 = vld [vmem:[%s10 + $0x20] sm:$0xff]
        %v1197 = vld [vmem:[%s10 + $0x28] sm:$0xff]
        %v1198 = vld [vmem:[%s10 + $0x30] sm:$0xff]
        %v1199 = vld [vmem:[%s10 + $0x38] sm:$0xff]
        %v1200 = vld [vmem:[%s10 + $0x40] sm:$0xff]
        %v1201 = vld [vmem:[%s10 + $0x48] sm:$0xff]
        %v1202 = vld [vmem:[%s10 + $0x50] sm:$0xff]
        %v1203 = vld [vmem:[%s10 + $0x58] sm:$0xff]
        %v1204 = vld [vmem:[%s10 + $0x60] sm:$0xff]
        %v1205 = vld [vmem:[%s10 + $0x68] sm:$0xff]
        %v1206 = vld [vmem:[%s10 + $0x70] sm:$0xff]
        %v1207 = vld [vmem:[%s10 + $0x78] sm:$0xff]
        %v1208 = vld [vmem:[%s10 + $0x80] sm:$0xff]
        %v1209 = vld [vmem:[%s10 + $0x88] sm:$0xff]
        %v1210 = vld [vmem:[%s10 + $0x90] sm:$0xff]
        %v1211 = vld [vmem:[%s10 + $0x98] sm:$0xff]
        %v1212 = vld [vmem:[%s10 + $0xa0] sm:$0xff]
        %v1213 = vld [vmem:[%s10 + $0xa8] sm:$0xff]
        %v1214 = vld [vmem:[%s10 + $0xb0] sm:$0xff]
        %v1215 = vld [vmem:[%s10 + $0xb8] sm:$0xff]
        %v1216 = vld [vmem:[%s10 + $0xc0] sm:$0xff]
        %v1217 = vld [vmem:[%s10 + $0xc8] sm:$0xff]
        %v1218 = vld [vmem:[%s10 + $0xd0] sm:$0xff]
        %v1219 = vld [vmem:[%s10 + $0xd8] sm:$0xff]
        %v1220 = vld [vmem:[%s10 + $0xe0] sm:$0xff]
        %v1221 = vld [vmem:[%s10 + $0xe8] sm:$0xff]
        %v1222 = vld [vmem:[%s10 + $0xf0] sm:$0xff]
        %v1223 = vld [vmem:[%s10 + $0xf8] sm:$0xff]
        %1224 = vrot.lane.b32.xlu0 %v1172, 1
        %v1225 = vpop.permute.xlu0 %1224
        %1226 = vrot.lane.b32.xlu0 %v1178, 1
        %v1227 = vpop.permute.xlu0 %1226
        %1228 = vrot.lane.b32.xlu0 %v1174, 1
        %v1229 = vpop.permute.xlu0 %1228
        %1230 = vrot.lane.b32.xlu0 %v1180, 1
        %v1231 = vpop.permute.xlu0 %1230
        %v1232 = vsel %vm804, %v1225, %v1229
        %v1233 = vsel %vm804, %v1227, %v1231
        %v1234 = vsel %vm804, %v1229, %v1225
        %v1235 = vsel %vm804, %v1231, %v1227
        %v1237 = vlaneseq
        %v1238 = vshrl.u32 %v1237, 7
        %v1239 = vsub.s32 0, %v1238
        %v1240 = vrot.slane %v1190, %v1239
        %v1241 = vlaneseq
        %v1242 = vshrl.u32 %v1241, 7
        %v1243 = vsub.s32 1, %v1242
        %v1244 = vrot.slane %v1190, %v1243
        %v1247 = vmul.f32 %v1234, %v1240
        %v1248 = vmul.f32 %v1232, %v1244
        %v1249 = vmul.f32 %v1235, %v1240
        %v1250 = vmul.f32 %v1233, %v1244
        %1251 = vrot.lane.b32.xlu0 %v1172, 127
        %v1252 = vpop.permute.xlu0 %1251
        %1253 = vrot.lane.b32.xlu0 %v1178, 127
        %v1254 = vpop.permute.xlu0 %1253
        %1255 = vrot.lane.b32.xlu0 %v1174, 127
        %v1256 = vpop.permute.xlu0 %1255
        %1257 = vrot.lane.b32.xlu0 %v1180, 127
        %v1258 = vpop.permute.xlu0 %1257
        %v1259 = vsel %vm842, %v1252, %v1256
        %v1260 = vsel %vm842, %v1254, %v1258
        %v1261 = vsel %vm842, %v1256, %v1252
        %v1262 = vsel %vm842, %v1258, %v1254
        %v1264 = vlaneseq
        %v1265 = vshrl.u32 %v1264, 7
        %v1266 = vsub.s32 0, %v1265
        %v1267 = vrot.slane %v1191, %v1266
        %v1268 = vlaneseq
        %v1269 = vshrl.u32 %v1268, 7
        %v1270 = vsub.s32 1, %v1269
        %v1271 = vrot.slane %v1191, %v1270
        %v1274 = vmul.f32 %v1259, %v1267
        %v1275 = vmul.f32 %v1261, %v1271
        %v1276 = vmul.f32 %v1260, %v1267
        %v1277 = vmul.f32 %v1262, %v1271
        %1279 = vset.pattern.permute.xlu0 0
        %1280 = vperm.xlu0 %1279, %v1186
        %v1281 = vpop.permute.xlu0 %1280
        %1284 = vset.pattern.permute.xlu0 0
        %1285 = vperm.xlu0 %1284, %v1187
        %v1286 = vpop.permute.xlu0 %1285
        %1289 = vset.pattern.permute.xlu0 0
        %1290 = vperm.xlu0 %1289, %v1188
        %v1291 = vpop.permute.xlu0 %1290
        %1294 = vset.pattern.permute.xlu0 0
        %1295 = vperm.xlu0 %1294, %v1189
        %v1296 = vpop.permute.xlu0 %1295
        %vm1298 = vcmask 392192
        %v1300 = vsel %vm1298, %v1182, 0
        %v1303 = vsel %vm1298, %v1183, 0
        %v1306 = vsel %vm1298, %v1184, 0
        %v1309 = vsel %vm1298, %v1185, 0
        %1311 = vmatprep.subr.mxu0 %v1248
        %1312 = vmatpush1.msra.mxu0 %v1247
        %1313 = vmatprep.subr.mxu0 %v1250
        %1314 = vmatpush1.msra.mxu0 %v1249
        %1315 = vmatprep.subr.mxu0 %v1174
        %1316 = vmatpush1.msra.mxu0 %v1172
        %1317 = vmatprep.subr.mxu0 %v1180
        %1318 = vmatpush1.msra.mxu0 %v1178
        %1319 = vmatprep.subr.mxu0 %v1275
        %1320 = vmatpush1.msra.mxu0 %v1274
        %1321 = vmatprep.subr.mxu0 %v1277
        %1322 = vmatpush1.msra.mxu0 %v1276
        %1323 = vmatprep.subr.mxu0 0.0
        %1324 = vmatpush1.msra.mxu0 0.0
        %1325 = vmatprep.subr.mxu0 0.0
        %1326 = vmatpush1.msra.mxu0 0.0
        %1327 = vmatprep.subr.mxu0 0.0
        %1328 = vmatpush1.msra.mxu0 0.0
        %1329 = vmatprep.subr.mxu0 0.0
        %1330 = vmatpush1.msra.mxu0 0.0
        %1331 = vmatprep.subr.mxu0 0.0
        %1332 = vmatpush1.msra.mxu0 0.0
        %1333 = vmatprep.subr.mxu0 0.0
        %1334 = vmatpush1.msra.mxu0 0.0
        %1335 = vmatprep.subr.mxu0 0.0
        %1336 = vmatpush1.msra.mxu0 0.0
        %1337 = vmatprep.subr.mxu0 0.0
        %1338 = vmatpush1.msra.mxu0 0.0
        %1339 = vmatprep.subr.mxu0 0.0
        %1340 = vmatpush1.msra.mxu0 0.0
        %1341 = vmatprep.subr.mxu0 0.0
        %1342 = vmatpush1.msra.mxu0 0.0
        %1343 = vmatprep.subr.mxu0 0.0
        %1344 = vmatpush1.msra.mxu0 0.0
        %1345 = vmatprep.subr.mxu0 0.0
        %1346 = vmatpush1.msra.mxu0 0.0
        %1347 = vmatprep.subr.mxu0 0.0
        %1348 = vmatpush1.msra.mxu0 0.0
        %1349 = vmatprep.subr.mxu0 0.0
        %1350 = vmatpush1.msra.mxu0 0.0
        %1351 = vmatprep.subr.mxu0 0.0
        %1352 = vmatpush1.msra.mxu0 0.0
        %1353 = vmatprep.subr.mxu0 0.0
        %1354 = vmatpush1.msra.mxu0 0.0
        %1355 = vmatprep.subr.mxu0 0.0
        %1356 = vmatpush1.msra.mxu0 0.0
        %1357 = vmatprep.subr.mxu0 0.0
        %1358 = vmatpush1.msra.mxu0 0.0
        %1359 = vmatprep.subr.mxu0 0.0
        %1360 = vmatpush1.msra.mxu0 0.0
        %1361 = vmatprep.subr.mxu0 0.0
        %1362 = vmatpush1.msra.mxu0 0.0
        %1363 = vmatprep.subr.mxu0 0.0
        %1364 = vmatpush1.msra.mxu0 0.0
        %1365 = vmatprep.subr.mxu0 0.0
        %1366 = vmatpush1.msra.mxu0 0.0
        %1367 = vmatprep.subr.mxu0 0.0
        %1368 = vmatpush1.msra.mxu0 0.0
        %1369 = vmatprep.subr.mxu0 0.0
        %1370 = vmatpush1.msra.mxu0 0.0
        %1371 = vmatprep.subr.mxu0 0.0
        %1372 = vmatpush1.msra.mxu0 0.0
        %1373 = vmatprep.subr.mxu0 0.0
        %1374 = vmatpush1.msra.mxu0 0.0
        %1375 = vmatprep.mubr.f32.mxu0 0.0
        %1376 = vmatmul.mubr.f32.gmra.mrb[0].mxu0 %v1300
        %v1377 = vpop.f32.mrb[0].mxu0
        %v1378 = vadd.f32 %v1281, %v1377
        %v1379 = vpop.f32.mrb[0].mxu0
        %v1380 = vadd.f32 %v1281, %v1379
        %1381 = vmatprep.mubr.f32.mxu0 0.0
        %1382 = vmatmul.mubr.f32.gmra.mrb[0].mxu0 %v1303
        %v1383 = vpop.f32.mrb[0].mxu0
        %v1384 = vadd.f32 %v1286, %v1383
        %v1385 = vpop.f32.mrb[0].mxu0
        %v1386 = vadd.f32 %v1286, %v1385
        %1387 = vmatprep.mubr.f32.mxu0 0.0
        %1388 = vmatmul.mubr.f32.gmra.mrb[0].mxu0 %v1306
        %v1389 = vpop.f32.mrb[0].mxu0
        %v1390 = vadd.f32 %v1291, %v1389
        %v1391 = vpop.f32.mrb[0].mxu0
        %v1392 = vadd.f32 %v1291, %v1391
        %1393 = vmatprep.mubr.f32.mxu0 0.0
        %1394 = vmatmul.mubr.f32.gmra.mrb[0].mxu0 %v1309
        %v1395 = vpop.f32.mrb[0].mxu0
        %v1396 = vadd.f32 %v1296, %v1395
        %v1397 = vpop.f32.mrb[0].mxu0
        %v1398 = vadd.f32 %v1296, %v1397
        %1399 = vdwg.mxu0
        %v1400 = vmax.f32 %v1378, 0.0
        %v1401 = vmax.f32 %v1380, 0.0
        %v1402 = vmax.f32 %v1384, 0.0
        %v1403 = vmax.f32 %v1386, 0.0
        %v1404 = vmax.f32 %v1390, 0.0
        %v1405 = vmax.f32 %v1392, 0.0
        %v1406 = vmax.f32 %v1396, 0.0
        %v1407 = vmax.f32 %v1398, 0.0
        %1408 = vrot.lane.b32.xlu0 %v1400, 127
        %v1409 = vpop.permute.xlu0 %1408
        %1410 = vrot.lane.b32.xlu0 %v1402, 127
        %v1411 = vpop.permute.xlu0 %1410
        %1412 = vrot.lane.b32.xlu0 %v1404, 127
        %v1413 = vpop.permute.xlu0 %1412
        %1414 = vrot.lane.b32.xlu0 %v1406, 127
        %v1415 = vpop.permute.xlu0 %1414
        %1416 = vrot.lane.b32.xlu0 %v1401, 127
        %v1417 = vpop.permute.xlu0 %1416
        %1418 = vrot.lane.b32.xlu0 %v1403, 127
        %v1419 = vpop.permute.xlu0 %1418
        %1420 = vrot.lane.b32.xlu0 %v1405, 127
        %v1421 = vpop.permute.xlu0 %1420
        %1422 = vrot.lane.b32.xlu0 %v1407, 127
        %v1423 = vpop.permute.xlu0 %1422
        %v1424 = vsel %vm842, %v1409, %v1417
        %v1425 = vsel %vm842, %v1411, %v1419
        %v1426 = vsel %vm842, %v1413, %v1421
        %v1427 = vsel %vm842, %v1415, %v1423
        %v1428 = vsel %vm842, %v1417, %v1409
        %v1429 = vsel %vm842, %v1419, %v1411
        %v1430 = vsel %vm842, %v1421, %v1413
        %v1431 = vsel %vm842, %v1423, %v1415
        %v1432 = vmax.f32 %v1400, %v1424
        %v1433 = vmax.f32 %v1401, %v1428
        %v1434 = vmax.f32 %v1402, %v1425
        %v1435 = vmax.f32 %v1403, %v1429
        %v1436 = vmax.f32 %v1404, %v1426
        %v1437 = vmax.f32 %v1405, %v1430
        %v1438 = vmax.f32 %v1406, %v1427
        %v1439 = vmax.f32 %v1407, %v1431
        %1440 = vmatprep.subr.mxu0 0.0
        %1441 = vmatpush1.msra.mxu0 %v1192
        %1442 = vmatprep.subr.mxu0 0.0
        %1443 = vmatpush1.msra.mxu0 %v1193
        %1444 = vmatprep.subr.mxu0 0.0
        %1445 = vmatpush1.msra.mxu0 %v1194
        %1446 = vmatprep.subr.mxu0 0.0
        %1447 = vmatpush1.msra.mxu0 %v1195
        %1448 = vmatprep.subr.mxu0 0.0
        %1449 = vmatpush1.msra.mxu0 %v1196
        %1450 = vmatprep.subr.mxu0 0.0
        %1451 = vmatpush1.msra.mxu0 %v1197
        %1452 = vmatprep.subr.mxu0 0.0
        %1453 = vmatpush1.msra.mxu0 %v1198
        %1454 = vmatprep.subr.mxu0 0.0
        %1455 = vmatpush1.msra.mxu0 %v1199
        %1456 = vmatprep.subr.mxu0 0.0
        %1457 = vmatpush1.msra.mxu0 %v1200
        %1458 = vmatprep.subr.mxu0 0.0
        %1459 = vmatpush1.msra.mxu0 %v1201
        %1460 = vmatprep.subr.mxu0 0.0
        %1461 = vmatpush1.msra.mxu0 %v1202
        %1462 = vmatprep.subr.mxu0 0.0
        %1463 = vmatpush1.msra.mxu0 %v1203
        %1464 = vmatprep.subr.mxu0 0.0
        %1465 = vmatpush1.msra.mxu0 %v1204
        %1466 = vmatprep.subr.mxu0 0.0
        %1467 = vmatpush1.msra.mxu0 %v1205
        %1468 = vmatprep.subr.mxu0 0.0
        %1469 = vmatpush1.msra.mxu0 %v1206
        %1470 = vmatprep.subr.mxu0 0.0
        %1471 = vmatpush1.msra.mxu0 %v1207
        %1472 = vmatprep.subr.mxu0 0.0
        %1473 = vmatpush1.msra.mxu0 %v1208
        %1474 = vmatprep.subr.mxu0 0.0
        %1475 = vmatpush1.msra.mxu0 %v1209
        %1476 = vmatprep.subr.mxu0 0.0
        %1477 = vmatpush1.msra.mxu0 %v1210
        %1478 = vmatprep.subr.mxu0 0.0
        %1479 = vmatpush1.msra.mxu0 %v1211
        %1480 = vmatprep.subr.mxu0 0.0
        %1481 = vmatpush1.msra.mxu0 %v1212
        %1482 = vmatprep.subr.mxu0 0.0
        %1483 = vmatpush1.msra.mxu0 %v1213
        %1484 = vmatprep.subr.mxu0 0.0
        %1485 = vmatpush1.msra.mxu0 %v1214
        %1486 = vmatprep.subr.mxu0 0.0
        %1487 = vmatpush1.msra.mxu0 %v1215
        %1488 = vmatprep.subr.mxu0 0.0
        %1489 = vmatpush1.msra.mxu0 %v1216
        %1490 = vmatprep.subr.mxu0 0.0
        %1491 = vmatpush1.msra.mxu0 %v1217
        %1492 = vmatprep.subr.mxu0 0.0
        %1493 = vmatpush1.msra.mxu0 %v1218
        %1494 = vmatprep.subr.mxu0 0.0
        %1495 = vmatpush1.msra.mxu0 %v1219
        %1496 = vmatprep.subr.mxu0 0.0
        %1497 = vmatpush1.msra.mxu0 %v1220
        %1498 = vmatprep.subr.mxu0 0.0
        %1499 = vmatpush1.msra.mxu0 %v1221
        %1500 = vmatprep.subr.mxu0 0.0
        %1501 = vmatpush1.msra.mxu0 %v1222
        %1502 = vmatprep.subr.mxu0 0.0
        %1503 = vmatpush1.msra.mxu0 %v1223
        %1504 = vmatprep.mubr.f32.mxu0 %v1433
        %1505 = vmatmul.mubr.f32.gmra.mrb[0].mxu0 %v1432
        %v1506 = vpop.f32.mrb[0].mxu0
        %v1507 = vadd.f32 0.0, %v1506
        %v1508 = vpop.f32.mrb[0].mxu0
        %1509 = vmatprep.mubr.f32.mxu0 %v1435
        %1510 = vmatmul.mubr.f32.gmra.mrb[0].mxu0 %v1434
        %v1511 = vpop.f32.mrb[0].mxu0
        %v1512 = vadd.f32 0.0, %v1511
        %v1513 = vpop.f32.mrb[0].mxu0
        %1514 = vmatprep.mubr.f32.mxu0 %v1437
        %1515 = vmatmul.mubr.f32.gmra.mrb[0].mxu0 %v1436
        %v1516 = vpop.f32.mrb[0].mxu0
        %v1517 = vadd.f32 0.0, %v1516
        %v1518 = vpop.f32.mrb[0].mxu0
        %1519 = vmatprep.mubr.f32.mxu0 %v1439
        %1520 = vmatmul.mubr.f32.gmra.mrb[0].mxu0 %v1438
        %v1521 = vpop.f32.mrb[0].mxu0
        %v1522 = vadd.f32 0.0, %v1521
        %v1523 = vpop.f32.mrb[0].mxu0
        %1524 = vdwg.mxu0
        %v1525 = vld [vmem:[%s11] sm:$0xff]
        %v1526 = vld [vmem:[%s11 + $0x8] sm:$0xff]
        %v1527 = vld [vmem:[%s11 + $0x10] sm:$0xff]
        %v1528 = vld [vmem:[%s11 + $0x18] sm:$0xff]
        %v1529 = vld [vmem:[%s11 + $0x20] sm:$0xff]
        %v1530 = vld [vmem:[%s11 + $0x28] sm:$0xff]
        %v1531 = vld [vmem:[%s11 + $0x30] sm:$0xff]
        %v1532 = vld [vmem:[%s11 + $0x38] sm:$0xff]
        %v1533 = vld [vmem:[%s12] sm:$0xff]
        %v1534 = vld [vmem:[%s12 + $0x8] sm:$0xff]
        %v1535 = vld [vmem:[%s12 + $0x10] sm:$0xff]
        %v1536 = vld [vmem:[%s12 + $0x18] sm:$0xff]
        %v1537 = vld [vmem:[%s12 + $0x20] sm:$0xff]
        %v1538 = vld [vmem:[%s12 + $0x28] sm:$0xff]
        %v1539 = vld [vmem:[%s12 + $0x30] sm:$0xff]
        %v1540 = vld [vmem:[%s12 + $0x38] sm:$0xff]
        %v1541 = vld [vmem:[%s13] sm:$0x1]
        %v1542 = vld [vmem:[%s14] sm:$0x1]
        %v1543 = vld [vmem:[%s15] sm:$0xff]
        %v1544 = vld [vmem:[%s15 + $0x8] sm:$0xff]
        %v1545 = vld [vmem:[%s15 + $0x10] sm:$0xff]
        %v1546 = vld [vmem:[%s15 + $0x18] sm:$0xff]
        %v1547 = vld [vmem:[%s15 + $0x20] sm:$0xff]
        %v1548 = vld [vmem:[%s15 + $0x28] sm:$0xff]
        %v1549 = vld [vmem:[%s15 + $0x30] sm:$0xff]
        %v1550 = vld [vmem:[%s15 + $0x38] sm:$0xff]
        %v1551 = vld [vmem:[%s15 + $0x40] sm:$0xff]
        %v1552 = vld [vmem:[%s15 + $0x48] sm:$0xff]
        %v1553 = vld [vmem:[%s15 + $0x50] sm:$0xff]
        %v1554 = vld [vmem:[%s15 + $0x58] sm:$0xff]
        %v1555 = vld [vmem:[%s15 + $0x60] sm:$0xff]
        %v1556 = vld [vmem:[%s15 + $0x68] sm:$0xff]
        %v1557 = vld [vmem:[%s15 + $0x70] sm:$0xff]
        %v1558 = vld [vmem:[%s15 + $0x78] sm:$0xff]
        %1559 = vrot.lane.b32.xlu0 %v1507, 1
        %v1560 = vpop.permute.xlu0 %1559
        %1561 = vrot.lane.b32.xlu0 %v1512, 1
        %v1562 = vpop.permute.xlu0 %1561
        %1563 = vrot.lane.b32.xlu0 %v1517, 1
        %v1564 = vpop.permute.xlu0 %1563
        %1565 = vrot.lane.b32.xlu0 %v1522, 1
        %v1566 = vpop.permute.xlu0 %1565
        %v1568 = vlaneseq
        %v1569 = vshrl.u32 %v1568, 7
        %v1570 = vsub.s32 0, %v1569
        %v1571 = vrot.slane %v1541, %v1570
        %v1573 = vmul.f32 %v1560, %v1571
        %v1574 = vmul.f32 %v1562, %v1571
        %v1575 = vmul.f32 %v1564, %v1571
        %v1576 = vmul.f32 %v1566, %v1571
        %1577 = vrot.lane.b32.xlu0 %v1507, 127
        %v1578 = vpop.permute.xlu0 %1577
        %1579 = vrot.lane.b32.xlu0 %v1512, 127
        %v1580 = vpop.permute.xlu0 %1579
        %1581 = vrot.lane.b32.xlu0 %v1517, 127
        %v1582 = vpop.permute.xlu0 %1581
        %1583 = vrot.lane.b32.xlu0 %v1522, 127
        %v1584 = vpop.permute.xlu0 %1583
        %v1586 = vlaneseq
        %v1587 = vshrl.u32 %v1586, 7
        %v1588 = vsub.s32 0, %v1587
        %v1589 = vrot.slane %v1542, %v1588
        %v1591 = vmul.f32 %v1578, %v1589
        %v1592 = vmul.f32 %v1580, %v1589
        %v1593 = vmul.f32 %v1582, %v1589
        %v1594 = vmul.f32 %v1584, %v1589
        %1596 = vset.pattern.permute.xlu0 0
        %1597 = vperm.xlu0 %1596, %v1533
        %v1598 = vpop.permute.xlu0 %1597
        %1601 = vset.pattern.permute.xlu0 0
        %1602 = vperm.xlu0 %1601, %v1534
        %v1603 = vpop.permute.xlu0 %1602
        %1606 = vset.pattern.permute.xlu0 0
        %1607 = vperm.xlu0 %1606, %v1535
        %v1608 = vpop.permute.xlu0 %1607
        %1611 = vset.pattern.permute.xlu0 0
        %1612 = vperm.xlu0 %1611, %v1536
        %v1613 = vpop.permute.xlu0 %1612
        %1616 = vset.pattern.permute.xlu0 0
        %1617 = vperm.xlu0 %1616, %v1537
        %v1618 = vpop.permute.xlu0 %1617
        %1621 = vset.pattern.permute.xlu0 0
        %1622 = vperm.xlu0 %1621, %v1538
        %v1623 = vpop.permute.xlu0 %1622
        %1626 = vset.pattern.permute.xlu0 0
        %1627 = vperm.xlu0 %1626, %v1539
        %v1628 = vpop.permute.xlu0 %1627
        %1631 = vset.pattern.permute.xlu0 0
        %1632 = vperm.xlu0 %1631, %v1540
        %v1633 = vpop.permute.xlu0 %1632
        %vm1635 = vcmask 785408
        %v1637 = vsel %vm1635, %v1525, 0
        %v1640 = vsel %vm1635, %v1526, 0
        %v1643 = vsel %vm1635, %v1527, 0
        %v1646 = vsel %vm1635, %v1528, 0
        %v1649 = vsel %vm1635, %v1529, 0
        %v1652 = vsel %vm1635, %v1530, 0
        %v1655 = vsel %vm1635, %v1531, 0
        %v1658 = vsel %vm1635, %v1532, 0
        %1660 = vmatprep.subr.mxu0 0.0
        %1661 = vmatpush1.msra.mxu0 %v1573
        %1662 = vmatprep.subr.mxu0 0.0
        %1663 = vmatpush1.msra.mxu0 %v1574
        %1664 = vmatprep.subr.mxu0 0.0
        %1665 = vmatpush1.msra.mxu0 %v1575
        %1666 = vmatprep.subr.mxu0 0.0
        %1667 = vmatpush1.msra.mxu0 %v1576
        %1668 = vmatprep.subr.mxu0 0.0
        %1669 = vmatpush1.msra.mxu0 %v1507
        %1670 = vmatprep.subr.mxu0 0.0
        %1671 = vmatpush1.msra.mxu0 %v1512
        %1672 = vmatprep.subr.mxu0 0.0
        %1673 = vmatpush1.msra.mxu0 %v1517
        %1674 = vmatprep.subr.mxu0 0.0
        %1675 = vmatpush1.msra.mxu0 %v1522
        %1676 = vmatprep.subr.mxu0 0.0
        %1677 = vmatpush1.msra.mxu0 %v1591
        %1678 = vmatprep.subr.mxu0 0.0
        %1679 = vmatpush1.msra.mxu0 %v1592
        %1680 = vmatprep.subr.mxu0 0.0
        %1681 = vmatpush1.msra.mxu0 %v1593
        %1682 = vmatprep.subr.mxu0 0.0
        %1683 = vmatpush1.msra.mxu0 %v1594
        %1684 = vmatprep.subr.mxu0 0.0
        %1685 = vmatpush1.msra.mxu0 0.0
        %1686 = vmatprep.subr.mxu0 0.0
        %1687 = vmatpush1.msra.mxu0 0.0
        %1688 = vmatprep.subr.mxu0 0.0
        %1689 = vmatpush1.msra.mxu0 0.0
        %1690 = vmatprep.subr.mxu0 0.0
        %1691 = vmatpush1.msra.mxu0 0.0
        %1692 = vmatprep.subr.mxu0 0.0
        %1693 = vmatpush1.msra.mxu0 0.0
        %1694 = vmatprep.subr.mxu0 0.0
        %1695 = vmatpush1.msra.mxu0 0.0
        %1696 = vmatprep.subr.mxu0 0.0
        %1697 = vmatpush1.msra.mxu0 0.0
        %1698 = vmatprep.subr.mxu0 0.0
        %1699 = vmatpush1.msra.mxu0 0.0
        %1700 = vmatprep.subr.mxu0 0.0
        %1701 = vmatpush1.msra.mxu0 0.0
        %1702 = vmatprep.subr.mxu0 0.0
        %1703 = vmatpush1.msra.mxu0 0.0
        %1704 = vmatprep.subr.mxu0 0.0
        %1705 = vmatpush1.msra.mxu0 0.0
        %1706 = vmatprep.subr.mxu0 0.0
        %1707 = vmatpush1.msra.mxu0 0.0
        %1708 = vmatprep.subr.mxu0 0.0
        %1709 = vmatpush1.msra.mxu0 0.0
        %1710 = vmatprep.subr.mxu0 0.0
        %1711 = vmatpush1.msra.mxu0 0.0
        %1712 = vmatprep.subr.mxu0 0.0
        %1713 = vmatpush1.msra.mxu0 0.0
        %1714 = vmatprep.subr.mxu0 0.0
        %1715 = vmatpush1.msra.mxu0 0.0
        %1716 = vmatprep.subr.mxu0 0.0
        %1717 = vmatpush1.msra.mxu0 0.0
        %1718 = vmatprep.subr.mxu0 0.0
        %1719 = vmatpush1.msra.mxu0 0.0
        %1720 = vmatprep.subr.mxu0 0.0
        %1721 = vmatpush1.msra.mxu0 0.0
        %1722 = vmatprep.subr.mxu0 0.0
        %1723 = vmatpush1.msra.mxu0 0.0
        %1724 = vmatprep.mubr.f32.mxu0 0.0
        %1725 = vmatmul.mubr.f32.gmra.mrb[0].mxu0 %v1637
        %v1726 = vpop.f32.mrb[0].mxu0
        %v1727 = vadd.f32 %v1598, %v1726
        %v1728 = vpop.f32.mrb[0].mxu0
        %1729 = vmatprep.mubr.f32.mxu0 0.0
        %1730 = vmatmul.mubr.f32.gmra.mrb[0].mxu0 %v1640
        %v1731 = vpop.f32.mrb[0].mxu0
        %v1732 = vadd.f32 %v1603, %v1731
        %v1733 = vpop.f32.mrb[0].mxu0
        %1734 = vmatprep.mubr.f32.mxu0 0.0
        %1735 = vmatmul.mubr.f32.gmra.mrb[0].mxu0 %v1643
        %v1736 = vpop.f32.mrb[0].mxu0
        %v1737 = vadd.f32 %v1608, %v1736
        %v1738 = vpop.f32.mrb[0].mxu0
        %1739 = vmatprep.mubr.f32.mxu0 0.0
        %1740 = vmatmul.mubr.f32.gmra.mrb[0].mxu0 %v1646
        %v1741 = vpop.f32.mrb[0].mxu0
        %v1742 = vadd.f32 %v1613, %v1741
        %v1743 = vpop.f32.mrb[0].mxu0
        %1744 = vmatprep.mubr.f32.mxu0 0.0
        %1745 = vmatmul.mubr.f32.gmra.mrb[0].mxu0 %v1649
        %v1746 = vpop.f32.mrb[0].mxu0
        %v1747 = vadd.f32 %v1618, %v1746
        %v1748 = vpop.f32.mrb[0].mxu0
        %1749 = vmatprep.mubr.f32.mxu0 0.0
        %1750 = vmatmul.mubr.f32.gmra.mrb[0].mxu0 %v1652
        %v1751 = vpop.f32.mrb[0].mxu0
        %v1752 = vadd.f32 %v1623, %v1751
        %v1753 = vpop.f32.mrb[0].mxu0
        %1754 = vmatprep.mubr.f32.mxu0 0.0
        %1755 = vmatmul.mubr.f32.gmra.mrb[0].mxu0 %v1655
        %v1756 = vpop.f32.mrb[0].mxu0
        %v1757 = vadd.f32 %v1628, %v1756
        %v1758 = vpop.f32.mrb[0].mxu0
        %1759 = vmatprep.mubr.f32.mxu0 0.0
        %1760 = vmatmul.mubr.f32.gmra.mrb[0].mxu0 %v1658
        %v1761 = vpop.f32.mrb[0].mxu0
        %v1762 = vadd.f32 %v1633, %v1761
        %v1763 = vpop.f32.mrb[0].mxu0
        %1764 = vdwg.mxu0
        %v1765 = vmax.f32 %v1727, 0.0
        %v1766 = vmax.f32 %v1732, 0.0
        %v1767 = vmax.f32 %v1737, 0.0
        %v1768 = vmax.f32 %v1742, 0.0
        %v1769 = vmax.f32 %v1747, 0.0
        %v1770 = vmax.f32 %v1752, 0.0
        %v1771 = vmax.f32 %v1757, 0.0
        %v1772 = vmax.f32 %v1762, 0.0
        %1773 = vrot.lane.b32.xlu0 %v1765, 127
        %v1774 = vpop.permute.xlu0 %1773
        %1775 = vrot.lane.b32.xlu0 %v1766, 127
        %v1776 = vpop.permute.xlu0 %1775
        %1777 = vrot.lane.b32.xlu0 %v1767, 127
        %v1778 = vpop.permute.xlu0 %1777
        %1779 = vrot.lane.b32.xlu0 %v1768, 127
        %v1780 = vpop.permute.xlu0 %1779
        %1781 = vrot.lane.b32.xlu0 %v1769, 127
        %v1782 = vpop.permute.xlu0 %1781
        %1783 = vrot.lane.b32.xlu0 %v1770, 127
        %v1784 = vpop.permute.xlu0 %1783
        %1785 = vrot.lane.b32.xlu0 %v1771, 127
        %v1786 = vpop.permute.xlu0 %1785
        %1787 = vrot.lane.b32.xlu0 %v1772, 127
        %v1788 = vpop.permute.xlu0 %1787
        %v1789 = vmax.f32 %v1765, %v1774
        %v1790 = vmax.f32 %v1766, %v1776
        %v1791 = vmax.f32 %v1767, %v1778
        %v1792 = vmax.f32 %v1768, %v1780
        %v1793 = vmax.f32 %v1769, %v1782
        %v1794 = vmax.f32 %v1770, %v1784
        %v1795 = vmax.f32 %v1771, %v1786
        %v1796 = vmax.f32 %v1772, %v1788
        %1797 = vmatprep.subr.mxu0 0.0
        %1798 = vmatpush1.msra.mxu0 %v1543
        %1799 = vmatprep.subr.mxu0 0.0
        %1800 = vmatpush1.msra.mxu0 %v1544
        %1801 = vmatprep.subr.mxu0 0.0
        %1802 = vmatpush1.msra.mxu0 %v1545
        %1803 = vmatprep.subr.mxu0 0.0
        %1804 = vmatpush1.msra.mxu0 %v1546
        %1805 = vmatprep.subr.mxu0 0.0
        %1806 = vmatpush1.msra.mxu0 %v1547
        %1807 = vmatprep.subr.mxu0 0.0
        %1808 = vmatpush1.msra.mxu0 %v1548
        %1809 = vmatprep.subr.mxu0 0.0
        %1810 = vmatpush1.msra.mxu0 %v1549
        %1811 = vmatprep.subr.mxu0 0.0
        %1812 = vmatpush1.msra.mxu0 %v1550
        %1813 = vmatprep.subr.mxu0 0.0
        %1814 = vmatpush1.msra.mxu0 %v1551
        %1815 = vmatprep.subr.mxu0 0.0
        %1816 = vmatpush1.msra.mxu0 %v1552
        %1817 = vmatprep.subr.mxu0 0.0
        %1818 = vmatpush1.msra.mxu0 %v1553
        %1819 = vmatprep.subr.mxu0 0.0
        %1820 = vmatpush1.msra.mxu0 %v1554
        %1821 = vmatprep.subr.mxu0 0.0
        %1822 = vmatpush1.msra.mxu0 %v1555
        %1823 = vmatprep.subr.mxu0 0.0
        %1824 = vmatpush1.msra.mxu0 %v1556
        %1825 = vmatprep.subr.mxu0 0.0
        %1826 = vmatpush1.msra.mxu0 %v1557
        %1827 = vmatprep.subr.mxu0 0.0
        %1828 = vmatpush1.msra.mxu0 %v1558
        %1829 = vmatprep.subr.mxu0 0.0
        %1830 = vmatpush1.msra.mxu0 0.0
        %1831 = vmatprep.subr.mxu0 0.0
        %1832 = vmatpush1.msra.mxu0 0.0
        %1833 = vmatprep.subr.mxu0 0.0
        %1834 = vmatpush1.msra.mxu0 0.0
        %1835 = vmatprep.subr.mxu0 0.0
        %1836 = vmatpush1.msra.mxu0 0.0
        %1837 = vmatprep.subr.mxu0 0.0
        %1838 = vmatpush1.msra.mxu0 0.0
        %1839 = vmatprep.subr.mxu0 0.0
        %1840 = vmatpush1.msra.mxu0 0.0
        %1841 = vmatprep.subr.mxu0 0.0
        %1842 = vmatpush1.msra.mxu0 0.0
        %1843 = vmatprep.subr.mxu0 0.0
        %1844 = vmatpush1.msra.mxu0 0.0
        %1845 = vmatprep.subr.mxu0 0.0
        %1846 = vmatpush1.msra.mxu0 0.0
        %1847 = vmatprep.subr.mxu0 0.0
        %1848 = vmatpush1.msra.mxu0 0.0
        %1849 = vmatprep.subr.mxu0 0.0
        %1850 = vmatpush1.msra.mxu0 0.0
        %1851 = vmatprep.subr.mxu0 0.0
        %1852 = vmatpush1.msra.mxu0 0.0
        %1853 = vmatprep.subr.mxu0 0.0
        %1854 = vmatpush1.msra.mxu0 0.0
        %1855 = vmatprep.subr.mxu0 0.0
        %1856 = vmatpush1.msra.mxu0 0.0
        %1857 = vmatprep.subr.mxu0 0.0
        %1858 = vmatpush1.msra.mxu0 0.0
        %1859 = vmatprep.subr.mxu0 0.0
        %1860 = vmatpush1.msra.mxu0 0.0
        %1861 = vmatprep.mubr.f32.mxu0 0.0
        %1862 = vmatmul.mubr.f32.gmra.mrb[0].mxu0 %v1789
        %v1863 = vpop.f32.mrb[0].mxu0
        %v1864 = vadd.f32 0.0, %v1863
        %v1865 = vpop.f32.mrb[0].mxu0
        %1866 = vmatprep.mubr.f32.mxu0 0.0
        %1867 = vmatmul.mubr.f32.gmra.mrb[0].mxu0 %v1790
        %v1868 = vpop.f32.mrb[0].mxu0
        %v1869 = vadd.f32 0.0, %v1868
        %v1870 = vpop.f32.mrb[0].mxu0
        %1871 = vmatprep.mubr.f32.mxu0 0.0
        %1872 = vmatmul.mubr.f32.gmra.mrb[0].mxu0 %v1791
        %v1873 = vpop.f32.mrb[0].mxu0
        %v1874 = vadd.f32 0.0, %v1873
        %v1875 = vpop.f32.mrb[0].mxu0
        %1876 = vmatprep.mubr.f32.mxu0 0.0
        %1877 = vmatmul.mubr.f32.gmra.mrb[0].mxu0 %v1792
        %v1878 = vpop.f32.mrb[0].mxu0
        %v1879 = vadd.f32 0.0, %v1878
        %v1880 = vpop.f32.mrb[0].mxu0
        %1881 = vmatprep.mubr.f32.mxu0 0.0
        %1882 = vmatmul.mubr.f32.gmra.mrb[0].mxu0 %v1793
        %v1883 = vpop.f32.mrb[0].mxu0
        %v1884 = vadd.f32 0.0, %v1883
        %v1885 = vpop.f32.mrb[0].mxu0
        %1886 = vmatprep.mubr.f32.mxu0 0.0
        %1887 = vmatmul.mubr.f32.gmra.mrb[0].mxu0 %v1794
        %v1888 = vpop.f32.mrb[0].mxu0
        %v1889 = vadd.f32 0.0, %v1888
        %v1890 = vpop.f32.mrb[0].mxu0
        %1891 = vmatprep.mubr.f32.mxu0 0.0
        %1892 = vmatmul.mubr.f32.gmra.mrb[0].mxu0 %v1795
        %v1893 = vpop.f32.mrb[0].mxu0
        %v1894 = vadd.f32 0.0, %v1893
        %v1895 = vpop.f32.mrb[0].mxu0
        %1896 = vmatprep.mubr.f32.mxu0 0.0
        %1897 = vmatmul.mubr.f32.gmra.mrb[0].mxu0 %v1796
        %v1898 = vpop.f32.mrb[0].mxu0
        %v1899 = vadd.f32 0.0, %v1898
        %v1900 = vpop.f32.mrb[0].mxu0
        %1901 = vdwg.mxu0
        %v1902 = vld [vmem:[%s16] sm:$0xff]
        %v1903 = vld [vmem:[%s16 + $0x8] sm:$0xff]
        %v1904 = vld [vmem:[%s16 + $0x10] sm:$0xff]
        %v1905 = vld [vmem:[%s16 + $0x18] sm:$0xff]
        %v1906 = vld [vmem:[%s16 + $0x20] sm:$0xff]
        %v1907 = vld [vmem:[%s16 + $0x28] sm:$0xff]
        %v1908 = vld [vmem:[%s16 + $0x30] sm:$0xff]
        %v1909 = vld [vmem:[%s16 + $0x38] sm:$0xff]
        %vm1910 = vcmask 523264
        %v1912 = vsel %vm1910, %v1864, 0
        %v1915 = vsel %vm1910, %v1869, 0
        %v1918 = vsel %vm1910, %v1874, 0
        %v1921 = vsel %vm1910, %v1879, 0
        %v1924 = vsel %vm1910, %v1884, 0
        %v1927 = vsel %vm1910, %v1889, 0
        %v1930 = vsel %vm1910, %v1894, 0
        %v1933 = vsel %vm1910, %v1899, 0
        %1935 = vmatprep.subr.mxu0 0.0
        %1936 = vmatpush1.msra.mxu0 %v1902
        %1937 = vmatprep.subr.mxu0 0.0
        %1938 = vmatpush1.msra.mxu0 %v1903
        %1939 = vmatprep.subr.mxu0 0.0
        %1940 = vmatpush1.msra.mxu0 %v1904
        %1941 = vmatprep.subr.mxu0 0.0
        %1942 = vmatpush1.msra.mxu0 %v1905
        %1943 = vmatprep.subr.mxu0 0.0
        %1944 = vmatpush1.msra.mxu0 %v1906
        %1945 = vmatprep.subr.mxu0 0.0
        %1946 = vmatpush1.msra.mxu0 %v1907
        %1947 = vmatprep.subr.mxu0 0.0
        %1948 = vmatpush1.msra.mxu0 %v1908
        %1949 = vmatprep.subr.mxu0 0.0
        %1950 = vmatpush1.msra.mxu0 %v1909
        %1951 = vmatprep.subr.mxu0 0.0
        %1952 = vmatpush1.msra.mxu0 0.0
        %1953 = vmatprep.subr.mxu0 0.0
        %1954 = vmatpush1.msra.mxu0 0.0
        %1955 = vmatprep.subr.mxu0 0.0
        %1956 = vmatpush1.msra.mxu0 0.0
        %1957 = vmatprep.subr.mxu0 0.0
        %1958 = vmatpush1.msra.mxu0 0.0
        %1959 = vmatprep.subr.mxu0 0.0
        %1960 = vmatpush1.msra.mxu0 0.0
        %1961 = vmatprep.subr.mxu0 0.0
        %1962 = vmatpush1.msra.mxu0 0.0
        %1963 = vmatprep.subr.mxu0 0.0
        %1964 = vmatpush1.msra.mxu0 0.0
        %1965 = vmatprep.subr.mxu0 0.0
        %1966 = vmatpush1.msra.mxu0 0.0
        %1967 = vmatprep.subr.mxu0 0.0
        %1968 = vmatpush1.msra.mxu0 0.0
        %1969 = vmatprep.subr.mxu0 0.0
        %1970 = vmatpush1.msra.mxu0 0.0
        %1971 = vmatprep.subr.mxu0 0.0
        %1972 = vmatpush1.msra.mxu0 0.0
        %1973 = vmatprep.subr.mxu0 0.0
        %1974 = vmatpush1.msra.mxu0 0.0
        %1975 = vmatprep.subr.mxu0 0.0
        %1976 = vmatpush1.msra.mxu0 0.0
        %1977 = vmatprep.subr.mxu0 0.0
        %1978 = vmatpush1.msra.mxu0 0.0
        %1979 = vmatprep.subr.mxu0 0.0
        %1980 = vmatpush1.msra.mxu0 0.0
        %1981 = vmatprep.subr.mxu0 0.0
        %1982 = vmatpush1.msra.mxu0 0.0
        %1983 = vmatprep.subr.mxu0 0.0
        %1984 = vmatpush1.msra.mxu0 0.0
        %1985 = vmatprep.subr.mxu0 0.0
        %1986 = vmatpush1.msra.mxu0 0.0
        %1987 = vmatprep.subr.mxu0 0.0
        %1988 = vmatpush1.msra.mxu0 0.0
        %1989 = vmatprep.subr.mxu0 0.0
        %1990 = vmatpush1.msra.mxu0 0.0
        %1991 = vmatprep.subr.mxu0 0.0
        %1992 = vmatpush1.msra.mxu0 0.0
        %1993 = vmatprep.subr.mxu0 0.0
        %1994 = vmatpush1.msra.mxu0 0.0
        %1995 = vmatprep.subr.mxu0 0.0
        %1996 = vmatpush1.msra.mxu0 0.0
        %1997 = vmatprep.subr.mxu0 0.0
        %1998 = vmatpush1.msra.mxu0 0.0
        %1999 = vmatprep.mubr.f32.mxu0 0.0
        %2000 = vmatmul.mubr.f32.gmra.mrb[0].mxu0 %v1912
        %v2001 = vpop.f32.mrb[0].mxu0
        %v2002 = vadd.f32 0.0, %v2001
        %v2003 = vpop.f32.mrb[0].mxu0
        %2004 = vmatprep.mubr.f32.mxu0 0.0
        %2005 = vmatmul.mubr.f32.gmra.mrb[0].mxu0 %v1915
        %v2006 = vpop.f32.mrb[0].mxu0
        %v2007 = vadd.f32 0.0, %v2006
        %v2008 = vpop.f32.mrb[0].mxu0
        %2009 = vmatprep.mubr.f32.mxu0 0.0
        %2010 = vmatmul.mubr.f32.gmra.mrb[0].mxu0 %v1918
        %v2011 = vpop.f32.mrb[0].mxu0
        %v2012 = vadd.f32 0.0, %v2011
        %v2013 = vpop.f32.mrb[0].mxu0
        %2014 = vmatprep.mubr.f32.mxu0 0.0
        %2015 = vmatmul.mubr.f32.gmra.mrb[0].mxu0 %v1921
        %v2016 = vpop.f32.mrb[0].mxu0
        %v2017 = vadd.f32 0.0, %v2016
        %v2018 = vpop.f32.mrb[0].mxu0
        %2019 = vmatprep.mubr.f32.mxu0 0.0
        %2020 = vmatmul.mubr.f32.gmra.mrb[0].mxu0 %v1924
        %v2021 = vpop.f32.mrb[0].mxu0
        %v2022 = vadd.f32 0.0, %v2021
        %v2023 = vpop.f32.mrb[0].mxu0
        %2024 = vmatprep.mubr.f32.mxu0 0.0
        %2025 = vmatmul.mubr.f32.gmra.mrb[0].mxu0 %v1927
        %v2026 = vpop.f32.mrb[0].mxu0
        %v2027 = vadd.f32 0.0, %v2026
        %v2028 = vpop.f32.mrb[0].mxu0
        %2029 = vmatprep.mubr.f32.mxu0 0.0
        %2030 = vmatmul.mubr.f32.gmra.mrb[0].mxu0 %v1930
        %v2031 = vpop.f32.mrb[0].mxu0
        %v2032 = vadd.f32 0.0, %v2031
        %v2033 = vpop.f32.mrb[0].mxu0
        %2034 = vmatprep.mubr.f32.mxu0 0.0
        %2035 = vmatmul.mubr.f32.gmra.mrb[0].mxu0 %v1933
        %v2036 = vpop.f32.mrb[0].mxu0
        %v2037 = vadd.f32 0.0, %v2036
        %v2038 = vpop.f32.mrb[0].mxu0
        %2039 = vdwg.mxu0
        %v2040 = vld [vmem:[%s17] sm:$0xff]
        %v2041 = vld [vmem:[%s18] sm:$0xff]
        %2043 = vset.pattern.permute.xlu0 0
        %2044 = vperm.xlu0 %2043, %v2041
        %v2045 = vpop.permute.xlu0 %2044
        %v2048 = vsel %vm1910, %v2040, 0
        %2050 = vmatprep.subr.mxu0 0.0
        %2051 = vmatpush1.msra.mxu0 %v2002
        %2052 = vmatprep.subr.mxu0 0.0
        %2053 = vmatpush1.msra.mxu0 %v2007
        %2054 = vmatprep.subr.mxu0 0.0
        %2055 = vmatpush1.msra.mxu0 %v2012
        %2056 = vmatprep.subr.mxu0 0.0
        %2057 = vmatpush1.msra.mxu0 %v2017
        %2058 = vmatprep.subr.mxu0 0.0
        %2059 = vmatpush1.msra.mxu0 %v2022
        %2060 = vmatprep.subr.mxu0 0.0
        %2061 = vmatpush1.msra.mxu0 %v2027
        %2062 = vmatprep.subr.mxu0 0.0
        %2063 = vmatpush1.msra.mxu0 %v2032
        %2064 = vmatprep.subr.mxu0 0.0
        %2065 = vmatpush1.msra.mxu0 %v2037
        %2066 = vmatprep.subr.mxu0 0.0
        %2067 = vmatpush1.msra.mxu0 0.0
        %2068 = vmatprep.subr.mxu0 0.0
        %2069 = vmatpush1.msra.mxu0 0.0
        %2070 = vmatprep.subr.mxu0 0.0
        %2071 = vmatpush1.msra.mxu0 0.0
        %2072 = vmatprep.subr.mxu0 0.0
        %2073 = vmatpush1.msra.mxu0 0.0
        %2074 = vmatprep.subr.mxu0 0.0
        %2075 = vmatpush1.msra.mxu0 0.0
        %2076 = vmatprep.subr.mxu0 0.0
        %2077 = vmatpush1.msra.mxu0 0.0
        %2078 = vmatprep.subr.mxu0 0.0
        %2079 = vmatpush1.msra.mxu0 0.0
        %2080 = vmatprep.subr.mxu0 0.0
        %2081 = vmatpush1.msra.mxu0 0.0
        %2082 = vmatprep.subr.mxu0 0.0
        %2083 = vmatpush1.msra.mxu0 0.0
        %2084 = vmatprep.subr.mxu0 0.0
        %2085 = vmatpush1.msra.mxu0 0.0
        %2086 = vmatprep.subr.mxu0 0.0
        %2087 = vmatpush1.msra.mxu0 0.0
        %2088 = vmatprep.subr.mxu0 0.0
        %2089 = vmatpush1.msra.mxu0 0.0
        %2090 = vmatprep.subr.mxu0 0.0
        %2091 = vmatpush1.msra.mxu0 0.0
        %2092 = vmatprep.subr.mxu0 0.0
        %2093 = vmatpush1.msra.mxu0 0.0
        %2094 = vmatprep.subr.mxu0 0.0
        %2095 = vmatpush1.msra.mxu0 0.0
        %2096 = vmatprep.subr.mxu0 0.0
        %2097 = vmatpush1.msra.mxu0 0.0
        %2098 = vmatprep.subr.mxu0 0.0
        %2099 = vmatpush1.msra.mxu0 0.0
        %2100 = vmatprep.subr.mxu0 0.0
        %2101 = vmatpush1.msra.mxu0 0.0
        %2102 = vmatprep.subr.mxu0 0.0
        %2103 = vmatpush1.msra.mxu0 0.0
        %2104 = vmatprep.subr.mxu0 0.0
        %2105 = vmatpush1.msra.mxu0 0.0
        %2106 = vmatprep.subr.mxu0 0.0
        %2107 = vmatpush1.msra.mxu0 0.0
        %2108 = vmatprep.subr.mxu0 0.0
        %2109 = vmatpush1.msra.mxu0 0.0
        %2110 = vmatprep.subr.mxu0 0.0
        %2111 = vmatpush1.msra.mxu0 0.0
        %2112 = vmatprep.subr.mxu0 0.0
        %2113 = vmatpush1.msra.mxu0 0.0
        %2114 = vmatprep.mubr.f32.mxu0 0.0
        %2115 = vmatmul.mubr.f32.gmra.mrb[0].mxu0 %v2048
        %v2116 = vpop.f32.mrb[0].mxu0
        %v2117 = vadd.f32 %v2045, %v2116
        %v2118 = vpop.f32.mrb[0].mxu0
        %2119 = vdwg.mxu0
        %vm2120 = vcmask 64512
        %2121 = vst.msk [vmem:[%s633] sm:$0xff] %vm2120, %v2117
        %s2122 = sand.u32 %s447, 1
        %s2123 = scalar_lea.sflag [#allocation4], %s2122
        %s2124 = sand.u32 %s447, 1
        %s2125 = smul.addr %s2124, 8
        %s2126 = scalar_lea.vmem [#allocation8], %s2125
        // Predicated region
        $region109: #{tpu_custom_call.1} parent=95 // pred_check
          %p2127 = pneg %p457
        $region110: #{tpu_custom_call.1} parent=95 // pred_check_branch
          %2129 = sbr.rel (%p2127) target = $region112
        $region111: #{tpu_custom_call.1} parent=95 // pred_region
          %s2131 = ssub.s32 128, 128
          %2132 = vsyncadd %s2123, %s2131
          %s2133 = smul.addr %s35, 128
          %s2134 = scalar_lea.hbm %s19, %s2133
          %s2136 = sshll.u32 %s2126, 4
          %s2137 = int_to_ptr.vmem [resolvable:$true] %s2136
          %2139 = dma.vmem_to_hbm [thread:$0]  %s2137, 128, %s2134, %s2123
        $region112: #{tpu_custom_call.1} parent=95 // pred_fallthru
          _
      $region96: #{tpu_custom_call.1} parent=5 // pred_fallthru
        _
      %p2140 = scmp.le.s32.totalorder 2, %s30
      // Predicated region
      $region113: #{tpu_custom_call.1} parent=5 // pred_check
        %p2141 = pneg %p2140
      $region114: #{tpu_custom_call.1} parent=5 // pred_check_branch
        %2143 = sbr.rel (%p2141) target = $region116
      $region115: #{tpu_custom_call.1} parent=5 // pred_region
        %s2144 = ssub.s32 %s30, 2
        // Predicated region
        $region117: #{tpu_custom_call.1} parent=115 // pred_check
          %p2145 = pneg %p463
        $region118: #{tpu_custom_call.1} parent=115 // pred_check_branch
          %2147 = sbr.rel (%p2145) target = $region120
        $region119: #{tpu_custom_call.1} parent=115 // pred_region
          %s2148 = sand.u32 %s448, 1
          %s2149 = scalar_lea.sflag [#allocation4], %s2148
          %s2150 = sand.u32 %s448, 1
          %s2151 = smul.addr %s2150, 8
          %s2152 = scalar_lea.vmem [#allocation8], %s2151
          %2153 = dma.done %s2149, 128
        $region120: #{tpu_custom_call.1} parent=115 // pred_fallthru
          _
      $region116: #{tpu_custom_call.1} parent=5 // pred_fallthru
        _
    $region6: #{tpu_custom_call.1} parent=1 // loop_footer
      %s34 = sadd.s32 1, %s30
    $region7: #{tpu_custom_call.1} parent=1 // loop_footer_branch
      %29 = sbr.rel target = $region3
    $region8: #{tpu_custom_call.1} parent=1 // loop_exit
      _
    %2154 = vsyncpa [#allocation3], 1
    %s2155 = scalar_lea.sflag [#allocation3], 1
    %2156 = vsyncpa %s2155, 1
    %2157 = vsyncpa [#allocation6], 1
    %2158 = vsyncpa [#allocation4], 1
    %s2159 = scalar_lea.sflag [#allocation4], 1
    %2160 = vsyncpa %s2159, 1

</llo_original>
